<compile_context>
chip_gen: v7x
topology: tpu7x:2x2x1
jax: 0.10.0
libtpu: 0.0.40
codegen_flags: <defaults>
</compile_context>

<pallas_src>
import functools

import jax
import jax.numpy as jnp
from jax.experimental import pallas as pl
from jax.experimental.pallas import tpu as pltpu


def _sigmoid(v):
    # Numerically stable logistic on the EUP: 1/(1+exp(-v)) == 0.5*(tanh(v/2)+1).
    return 0.5 * (jnp.tanh(0.5 * v) + 1.0)


def cam_kernel(w7_ref, x_ref, w1_ref, w2_ref, out_ref, *, H, W):
    """Fused CAM forward for one batch element, in (C, S=H*W) layout.

    w7_ref : SMEM (98,)      flattened (2, 7, 7) spatial-conv weight
    x_ref  : VMEM (1, C, S)  input block (lane-dense)
    w1_ref : VMEM (Cr, C)    fc1 weight
    w2_ref : VMEM (C, Cr)    fc2 weight
    out_ref: VMEM (1, C, S)  output block (lane-dense)
    """
    S = H * W
    C = x_ref.shape[1]
    x = x_ref[0]                                             # (C, S)

    # ---- channel attention --------------------------------------------------
    # avg pool on the MXU (otherwise idle here); max pool on the XLU.
    ones_s = jnp.full((S, 1), 1.0 / S, jnp.float32)
    avg_c = jnp.dot(x, ones_s, preferred_element_type=jnp.float32)       # (C, 1)
    max_c = jnp.max(x, axis=1, keepdims=True)                            # (C, 1)
    pooled = jnp.concatenate([avg_c, max_c], axis=1)                     # (C, 2)

    hidden = jnp.maximum(
        jnp.dot(w1_ref[...], pooled, preferred_element_type=jnp.float32), 0.0)  # (Cr, 2)
    logits = jnp.dot(w2_ref[...], hidden, preferred_element_type=jnp.float32)   # (C, 2)
    ca = _sigmoid(jnp.sum(logits, axis=1, keepdims=True))                        # (C, 1)

    # Stage the channel-gated activation in the output block and read it back:
    # keeps only one (C, S) slab live through the spatial phase.
    out_ref[0] = x * ca
    xca = out_ref[0]                                         # (C, S)

    # ---- spatial attention: 7x7 conv over [mean_c, max_c] maps ---------------
    ones_c = jnp.full((1, C), 1.0 / C, jnp.float32)
    sp_avg = jnp.dot(ones_c, xca, preferred_element_type=jnp.float32)    # (1, S)  MXU
    sp_max = jnp.max(xca, axis=0, keepdims=True)                         # (1, S)  XLU

    # Pack both maps into one 2-sublane slab, zero-padded by 3*W+3 per side:
    # vertical out-of-range taps land in the pad (read 0); horizontal ones are
    # killed by a per-column mask applied once per column offset.
    PAD = 3 * W + 3
    sp = jnp.concatenate([sp_avg, sp_max], axis=0)           # (2, S): row0=avg, row1=max
    zpad = jnp.zeros((2, PAD), jnp.float32)
    sp_p = jnp.concatenate([zpad, sp, zpad], axis=1)         # (2, S + 2*PAD)

    col = jax.lax.broadcasted_iota(jnp.int32, (2, S), 1) % W
    row0 = jax.lax.broadcasted_iota(jnp.int32, (2, S), 0) == 0

    acc = jnp.zeros((2, S), jnp.float32)
    for j in range(7):                                       # column taps (mask hoisted)
        dj = j - 3
        partial = jnp.zeros((2, S), jnp.float32)
        for i in range(7):                                   # row taps, fully unrolled
            k = i * 7 + j
            off = PAD + (i - 3) * W + dj                     # static lane offset
            w2s = jnp.where(row0, w7_ref[k], w7_ref[49 + k])  # per-sublane tap weight
            partial = partial + w2s * sp_p[:, off:off + S]   # one packed slice per tap
        col_ok = jnp.logical_and(col + dj >= 0, col + dj < W)
        acc = acc + jnp.where(col_ok, partial, 0.0)

    conv = jnp.sum(acc, axis=0, keepdims=True)               # (1, S): fold avg+max rows
    sa = _sigmoid(conv)

    # ---- final gating: one lane-dense store ----------------------------------
    out_ref[0] = out_ref[0] * sa                             # broadcast over channels


def cam_forward(x_nchw, w1, w2, w7):
    """x_nchw: (B, C, H, W); w1: (Cr, C) fc1; w2: (C, Cr) fc2; w7: (1, 2, 7, 7) conv1."""
    B, C, H, W = x_nchw.shape
    Cr = w1.shape[0]
    S = H * W

    x_cs = x_nchw.reshape(B, C, S)          # free view of the NCHW bytes (no transpose)
    w7_flat = w7.reshape(-1).astype(jnp.float32)   # (98,) scalar taps -> SMEM

    # Double-buffered in+out blocks plus temporaries; keep headroom but stay
    # under every generation's physical budget (v7x: 64 MiB).
    block_bytes = C * S * 4
    vmem_limit = int(min(96 * 1024 * 1024, max(16 * 1024 * 1024, 8 * block_bytes)))

    out_cs = pl.pallas_call(
        functools.partial(cam_kernel, H=H, W=W),
        out_shape=jax.ShapeDtypeStruct((B, C, S), jnp.float32),
        grid=(B,),
        in_specs=[
            pl.BlockSpec(memory_space=pltpu.MemorySpace.SMEM),   # w7 taps (scalars)
            pl.BlockSpec((1, C, S), lambda b: (b, 0, 0)),        # x, lane-dense on S
            pl.BlockSpec((Cr, C), lambda b: (0, 0)),             # fc1 weight (resident)
            pl.BlockSpec((C, Cr), lambda b: (0, 0)),             # fc2 weight (resident)
        ],
        out_specs=pl.BlockSpec((1, C, S), lambda b: (b, 0, 0)),
        compiler_params=pltpu.CompilerParams(
            dimension_semantics=("parallel",),
            vmem_limit_bytes=vmem_limit),
    )(w7_flat, x_cs, w1, w2)

    return out_cs.reshape(B, C, H, W)


# ---------------------------------------------------------------------------
# Pure-JAX reference (mirrors the PyTorch forward exactly)
# ---------------------------------------------------------------------------
def cam_reference(x, w1, w2, w7):
    avg = x.mean(axis=(2, 3))                              # (B, C)
    mx = x.max(axis=(2, 3))                                # (B, C)

    def mlp(v):
        return jnp.maximum(v @ w1.T, 0.0) @ w2.T

    ca = jax.nn.sigmoid(mlp(avg) + mlp(mx))                # (B, C)
    xca = x * ca[:, :, None, None]
    sp_avg = xca.mean(axis=1, keepdims=True)
    sp_max = xca.max(axis=1, keepdims=True)
    y = jnp.concatenate([sp_avg, sp_max], axis=1)          # (B, 2, H, W)
    conv = jax.lax.conv_general_dilated(
        y, w7, window_strides=(1, 1), padding=((3, 3), (3, 3)),
        dimension_numbers=("NCHW", "OIHW", "NCHW"))
    return jax.nn.sigmoid(conv) * xca


if __name__ == "__main__":
    B, C, H, W = 2, 32, 16, 16                             # in_planes=32 -> Cr = 32//16 = 2
    Cr = C // 16

    key = jax.random.PRNGKey(0)
    kx, k1, k2, k7 = jax.random.split(key, 4)
    x = jax.random.normal(kx, (B, C, H, W), jnp.float32)
    w1 = 0.1 * jax.random.normal(k1, (Cr, C), jnp.float32)       # fc1 (1x1 conv, no bias)
    w2 = 0.1 * jax.random.normal(k2, (C, Cr), jnp.float32)       # fc2 (1x1 conv, no bias)
    w7 = 0.1 * jax.random.normal(k7, (1, 2, 7, 7), jnp.float32)  # conv1 (7x7, pad 3, no bias)

    out = jax.block_until_ready(cam_forward(x, w1, w2, w7))
    ref = jax.block_until_ready(cam_reference(x, w1, w2, w7))

    assert out.shape == (B, C, H, W)
    assert jnp.allclose(out, ref, atol=1e-4, rtol=1e-4), float(jnp.max(jnp.abs(out - ref)))
    print("KERNEL_OK")
</pallas_src>

<mosaic_0001>
module attributes {stable_mosaic.version = 11 : i64} {
  func.func @cam_kernel(%arg0: i32, %arg1: memref<98xf32, #tpu.memory_space<smem>>, %arg2: memref<1x32x256xf32, #tpu.memory_space<vmem>>, %arg3: memref<2x32xf32, #tpu.memory_space<vmem>>, %arg4: memref<32x2xf32, #tpu.memory_space<vmem>>, %arg5: memref<1x32x256xf32, #tpu.memory_space<vmem>>) attributes {dimension_semantics = [#tpu.dimension_semantics<parallel>], iteration_bounds = array<i64: 2>, scalar_prefetch = 0 : i64, scratch_operands = 0 : i64, tpu.core_type = #tpu.core_type<tc>, window_params = [{transform_indices = @transform_0, window_bounds = array<i64: 98>}, {transform_indices = @transform_1, window_bounds = array<i64: 1, 32, 256>}, {pipeline_mode = #tpu.pipeline_mode<synchronous>, transform_indices = @transform_2, window_bounds = array<i64: 2, 32>}, {pipeline_mode = #tpu.pipeline_mode<synchronous>, transform_indices = @transform_3, window_bounds = array<i64: 32, 2>}, {transform_indices = @transform_4, window_bounds = array<i64: 1, 32, 256>}]} {
    %c0 = arith.constant 0 : index
    %c0_0 = arith.constant 0 : index
    %c0_1 = arith.constant 0 : index
    %0 = vector.load %arg2[%c0, %c0_0, %c0_1] : memref<1x32x256xf32, #tpu.memory_space<vmem>>, vector<1x32x256xf32>
    %1 = vector.shape_cast %0 : vector<1x32x256xf32> to vector<32x256xf32>
    %cst = arith.constant 3.906250e-03 : f32
    %2 = vector.broadcast %cst : f32 to vector<256x1xf32>
    %cst_2 = arith.constant dense<0.000000e+00> : vector<32x1xf32>
    %3 = tpu.matmul %1, %2, %cst_2 {dimension_numbers = #tpu.dot_dimension_numbers<[1], [0], [0], [1], [0, 0, 1, 1], [], []>} : vector<32x256xf32>, vector<256x1xf32>, vector<32x1xf32> -> vector<32x1xf32>
    %cst_3 = arith.constant dense<0xFF800000> : vector<32xf32>
    %4 = vector.multi_reduction <maximumf>, %1, %cst_3 [1] : vector<32x256xf32> to vector<32xf32>
    %5 = vector.shape_cast %4 : vector<32xf32> to vector<32x1xf32>
    %6 = tpu.concatenate %3, %5 in 1 : vector<32x1xf32>, vector<32x1xf32> -> vector<32x2xf32>
    %c0_4 = arith.constant 0 : index
    %c0_5 = arith.constant 0 : index
    %7 = vector.load %arg3[%c0_4, %c0_5] : memref<2x32xf32, #tpu.memory_space<vmem>>, vector<2x32xf32>
    %cst_6 = arith.constant dense<0.000000e+00> : vector<2x2xf32>
    %8 = tpu.matmul %7, %6, %cst_6 {dimension_numbers = #tpu.dot_dimension_numbers<[1], [0], [0], [1], [0, 0, 1, 1], [], []>} : vector<2x32xf32>, vector<32x2xf32>, vector<2x2xf32> -> vector<2x2xf32>
    %cst_7 = arith.constant 0.000000e+00 : f32
    %9 = vector.broadcast %cst_7 : f32 to vector<2x2xf32>
    %10 = arith.maximumf %8, %9 : vector<2x2xf32>
    %c0_8 = arith.constant 0 : index
    %c0_9 = arith.constant 0 : index
    %11 = vector.load %arg4[%c0_8, %c0_9] : memref<32x2xf32, #tpu.memory_space<vmem>>, vector<32x2xf32>
    %cst_10 = arith.constant dense<0.000000e+00> : vector<32x2xf32>
    %12 = tpu.matmul %11, %10, %cst_10 {dimension_numbers = #tpu.dot_dimension_numbers<[1], [0], [0], [1], [0, 0, 1, 1], [], []>} : vector<32x2xf32>, vector<2x2xf32>, vector<32x2xf32> -> vector<32x2xf32>
    %cst_11 = arith.constant dense<0.000000e+00> : vector<32xf32>
    %13 = vector.multi_reduction <add>, %12, %cst_11 [1] : vector<32x2xf32> to vector<32xf32>
    %14 = vector.shape_cast %13 : vector<32xf32> to vector<32x1xf32>
    %cst_12 = arith.constant 5.000000e-01 : f32
    %15 = vector.broadcast %cst_12 : f32 to vector<32x1xf32>
    %16 = arith.mulf %15, %14 : vector<32x1xf32>
    %17 = math.tanh %16 : vector<32x1xf32>
    %cst_13 = arith.constant 1.000000e+00 : f32
    %18 = vector.broadcast %cst_13 : f32 to vector<32x1xf32>
    %19 = arith.addf %17, %18 : vector<32x1xf32>
    %cst_14 = arith.constant 5.000000e-01 : f32
    %20 = vector.broadcast %cst_14 : f32 to vector<32x1xf32>
    %21 = arith.mulf %20, %19 : vector<32x1xf32>
    %22 = vector.broadcast %21 : vector<32x1xf32> to vector<32x256xf32>
    %23 = arith.mulf %1, %22 : vector<32x256xf32>
    %c0_15 = arith.constant 0 : index
    %c0_16 = arith.constant 0 : index
    %c0_17 = arith.constant 0 : index
    %24 = vector.load %arg5[%c0_15, %c0_16, %c0_17] : memref<1x32x256xf32, #tpu.memory_space<vmem>>, vector<1x32x256xf32>
    %25 = vector.shape_cast %24 : vector<1x32x256xf32> to vector<32x256xf32>
    %26 = vector.shape_cast %23 : vector<32x256xf32> to vector<1x32x256xf32>
    tpu.vector_store %arg5[%c0_15, %c0_16, %c0_17], %26 {strides = array<i32>} : memref<1x32x256xf32, #tpu.memory_space<vmem>>, vector<1x32x256xf32>,
    %c0_18 = arith.constant 0 : index
    %c0_19 = arith.constant 0 : index
    %c0_20 = arith.constant 0 : index
    %27 = vector.load %arg5[%c0_18, %c0_19, %c0_20] : memref<1x32x256xf32, #tpu.memory_space<vmem>>, vector<1x32x256xf32>
    %28 = vector.shape_cast %27 : vector<1x32x256xf32> to vector<32x256xf32>
    %cst_21 = arith.constant 3.125000e-02 : f32
    %29 = vector.broadcast %cst_21 : f32 to vector<1x32xf32>
    %cst_22 = arith.constant dense<0.000000e+00> : vector<1x256xf32>
    %30 = tpu.matmul %29, %28, %cst_22 {dimension_numbers = #tpu.dot_dimension_numbers<[1], [0], [0], [1], [0, 0, 1, 1], [], []>} : vector<1x32xf32>, vector<32x256xf32>, vector<1x256xf32> -> vector<1x256xf32>
    %cst_23 = arith.constant dense<0xFF800000> : vector<256xf32>
    %31 = vector.multi_reduction <maximumf>, %28, %cst_23 [0] : vector<32x256xf32> to vector<256xf32>
    %32 = vector.shape_cast %31 : vector<256xf32> to vector<1x256xf32>
    %33 = tpu.concatenate %30, %32 in 0 : vector<1x256xf32>, vector<1x256xf32> -> vector<2x256xf32>
    %cst_24 = arith.constant 0.000000e+00 : f32
    %34 = vector.broadcast %cst_24 : f32 to vector<2x51xf32>
    %35 = tpu.concatenate %34, %33, %34 in 1 : vector<2x51xf32>, vector<2x256xf32>, vector<2x51xf32> -> vector<2x358xf32>
    %36 = tpu.iota {dimensions = array<i32: 1>} : vector<2x256xi32>
    %c16_i32 = arith.constant 16 : i32
    %c0_i32 = arith.constant 0 : i32
    %37 = arith.cmpi eq, %c16_i32, %c0_i32 : i32
    %c1_i32 = arith.constant 1 : i32
    %38 = arith.select %37, %c1_i32, %c16_i32 : i32
    %39 = vector.broadcast %38 : i32 to vector<2x256xi32>
    %40 = arith.remsi %36, %39 : vector<2x256xi32>
    %c0_i32_25 = arith.constant 0 : i32
    %41 = vector.broadcast %c0_i32_25 : i32 to vector<2x256xi32>
    %42 = arith.cmpi ne, %40, %41 : vector<2x256xi32>
    %c0_i32_26 = arith.constant 0 : i32
    %43 = vector.broadcast %c0_i32_26 : i32 to vector<2x256xi32>
    %44 = arith.cmpi slt, %40, %43 : vector<2x256xi32>
    %c0_i32_27 = arith.constant 0 : i32
    %45 = arith.cmpi slt, %38, %c0_i32_27 : i32
    %46 = vector.broadcast %45 : i1 to vector<2x256xi1>
    %47 = vector.broadcast %46 : vector<2x256xi1> to vector<2x256xi1>
    %48 = arith.xori %44, %47 : vector<2x256xi1>
    %49 = arith.andi %48, %42 : vector<2x256xi1>
    %50 = vector.broadcast %38 : i32 to vector<2x256xi32>
    %51 = arith.addi %40, %50 : vector<2x256xi32>
    %52 = arith.select %49, %51, %40 : vector<2x256xi1>, vector<2x256xi32>
    %53 = tpu.iota {dimensions = array<i32: 0>} : vector<2x256xi32>
    %c0_i32_28 = arith.constant 0 : i32
    %54 = vector.broadcast %c0_i32_28 : i32 to vector<2x256xi32>
    %55 = arith.cmpi eq, %53, %54 : vector<2x256xi32>
    %cst_29 = arith.constant 0.000000e+00 : f32
    %56 = vector.broadcast %cst_29 : f32 to vector<2x256xf32>
    %cst_30 = arith.constant 0.000000e+00 : f32
    %57 = vector.broadcast %cst_30 : f32 to vector<2x256xf32>
    %c0_31 = arith.constant 0 : index
    %58 = memref.load %arg1[%c0_31] : memref<98xf32, #tpu.memory_space<smem>>
    %c49 = arith.constant 49 : index
    %59 = memref.load %arg1[%c49] : memref<98xf32, #tpu.memory_space<smem>>
    %60 = vector.broadcast %58 : f32 to vector<2x256xf32>
    %61 = vector.broadcast %59 : f32 to vector<2x256xf32>
    %62 = arith.select %55, %60, %61 : vector<2x256xi1>, vector<2x256xf32>
    %63 = vector.extract_strided_slice %35 {offsets = [0, 0], sizes = [2, 256], strides = [1, 1]} : vector<2x358xf32> to vector<2x256xf32>
    %64 = arith.mulf %62, %63 : vector<2x256xf32>
    %65 = arith.addf %57, %64 : vector<2x256xf32>
    %c7 = arith.constant 7 : index
    %66 = memref.load %arg1[%c7] : memref<98xf32, #tpu.memory_space<smem>>
    %c56 = arith.constant 56 : index
    %67 = memref.load %arg1[%c56] : memref<98xf32, #tpu.memory_space<smem>>
    %68 = vector.broadcast %66 : f32 to vector<2x256xf32>
    %69 = vector.broadcast %67 : f32 to vector<2x256xf32>
    %70 = arith.select %55, %68, %69 : vector<2x256xi1>, vector<2x256xf32>
    %71 = vector.extract_strided_slice %35 {offsets = [0, 16], sizes = [2, 256], strides = [1, 1]} : vector<2x358xf32> to vector<2x256xf32>
    %72 = arith.mulf %70, %71 : vector<2x256xf32>
    %73 = arith.addf %65, %72 : vector<2x256xf32>
    %c14 = arith.constant 14 : index
    %74 = memref.load %arg1[%c14] : memref<98xf32, #tpu.memory_space<smem>>
    %c63 = arith.constant 63 : index
    %75 = memref.load %arg1[%c63] : memref<98xf32, #tpu.memory_space<smem>>
    %76 = vector.broadcast %74 : f32 to vector<2x256xf32>
    %77 = vector.broadcast %75 : f32 to vector<2x256xf32>
    %78 = arith.select %55, %76, %77 : vector<2x256xi1>, vector<2x256xf32>
    %79 = vector.extract_strided_slice %35 {offsets = [0, 32], sizes = [2, 256], strides = [1, 1]} : vector<2x358xf32> to vector<2x256xf32>
    %80 = arith.mulf %78, %79 : vector<2x256xf32>
    %81 = arith.addf %73, %80 : vector<2x256xf32>
    %c21 = arith.constant 21 : index
    %82 = memref.load %arg1[%c21] : memref<98xf32, #tpu.memory_space<smem>>
    %c70 = arith.constant 70 : index
    %83 = memref.load %arg1[%c70] : memref<98xf32, #tpu.memory_space<smem>>
    %84 = vector.broadcast %82 : f32 to vector<2x256xf32>
    %85 = vector.broadcast %83 : f32 to vector<2x256xf32>
    %86 = arith.select %55, %84, %85 : vector<2x256xi1>, vector<2x256xf32>
    %87 = vector.extract_strided_slice %35 {offsets = [0, 48], sizes = [2, 256], strides = [1, 1]} : vector<2x358xf32> to vector<2x256xf32>
    %88 = arith.mulf %86, %87 : vector<2x256xf32>
    %89 = arith.addf %81, %88 : vector<2x256xf32>
    %c28 = arith.constant 28 : index
    %90 = memref.load %arg1[%c28] : memref<98xf32, #tpu.memory_space<smem>>
    %c77 = arith.constant 77 : index
    %91 = memref.load %arg1[%c77] : memref<98xf32, #tpu.memory_space<smem>>
    %92 = vector.broadcast %90 : f32 to vector<2x256xf32>
    %93 = vector.broadcast %91 : f32 to vector<2x256xf32>
    %94 = arith.select %55, %92, %93 : vector<2x256xi1>, vector<2x256xf32>
    %95 = vector.extract_strided_slice %35 {offsets = [0, 64], sizes = [2, 256], strides = [1, 1]} : vector<2x358xf32> to vector<2x256xf32>
    %96 = arith.mulf %94, %95 : vector<2x256xf32>
    %97 = arith.addf %89, %96 : vector<2x256xf32>
    %c35 = arith.constant 35 : index
    %98 = memref.load %arg1[%c35] : memref<98xf32, #tpu.memory_space<smem>>
    %c84 = arith.constant 84 : index
    %99 = memref.load %arg1[%c84] : memref<98xf32, #tpu.memory_space<smem>>
    %100 = vector.broadcast %98 : f32 to vector<2x256xf32>
    %101 = vector.broadcast %99 : f32 to vector<2x256xf32>
    %102 = arith.select %55, %100, %101 : vector<2x256xi1>, vector<2x256xf32>
    %103 = vector.extract_strided_slice %35 {offsets = [0, 80], sizes = [2, 256], strides = [1, 1]} : vector<2x358xf32> to vector<2x256xf32>
    %104 = arith.mulf %102, %103 : vector<2x256xf32>
    %105 = arith.addf %97, %104 : vector<2x256xf32>
    %c42 = arith.constant 42 : index
    %106 = memref.load %arg1[%c42] : memref<98xf32, #tpu.memory_space<smem>>
    %c91 = arith.constant 91 : index
    %107 = memref.load %arg1[%c91] : memref<98xf32, #tpu.memory_space<smem>>
    %108 = vector.broadcast %106 : f32 to vector<2x256xf32>
    %109 = vector.broadcast %107 : f32 to vector<2x256xf32>
    %110 = arith.select %55, %108, %109 : vector<2x256xi1>, vector<2x256xf32>
    %111 = vector.extract_strided_slice %35 {offsets = [0, 96], sizes = [2, 256], strides = [1, 1]} : vector<2x358xf32> to vector<2x256xf32>
    %112 = arith.mulf %110, %111 : vector<2x256xf32>
    %113 = arith.addf %105, %112 : vector<2x256xf32>
    %c-3_i32 = arith.constant -3 : i32
    %114 = vector.broadcast %c-3_i32 : i32 to vector<2x256xi32>
    %115 = arith.addi %52, %114 : vector<2x256xi32>
    %c0_i32_32 = arith.constant 0 : i32
    %116 = vector.broadcast %c0_i32_32 : i32 to vector<2x256xi32>
    %117 = arith.cmpi sge, %115, %116 : vector<2x256xi32>
    %c-3_i32_33 = arith.constant -3 : i32
    %118 = vector.broadcast %c-3_i32_33 : i32 to vector<2x256xi32>
    %119 = arith.addi %52, %118 : vector<2x256xi32>
    %c16_i32_34 = arith.constant 16 : i32
    %120 = vector.broadcast %c16_i32_34 : i32 to vector<2x256xi32>
    %121 = arith.cmpi slt, %119, %120 : vector<2x256xi32>
    %122 = arith.andi %117, %121 : vector<2x256xi1>
    %cst_35 = arith.constant 0.000000e+00 : f32
    %123 = vector.broadcast %cst_35 : f32 to vector<2x256xf32>
    %124 = arith.select %122, %113, %123 : vector<2x256xi1>, vector<2x256xf32>
    %125 = arith.addf %56, %124 : vector<2x256xf32>
    %cst_36 = arith.constant 0.000000e+00 : f32
    %126 = vector.broadcast %cst_36 : f32 to vector<2x256xf32>
    %c1 = arith.constant 1 : index
    %127 = memref.load %arg1[%c1] : memref<98xf32, #tpu.memory_space<smem>>
    %c50 = arith.constant 50 : index
    %128 = memref.load %arg1[%c50] : memref<98xf32, #tpu.memory_space<smem>>
    %129 = vector.broadcast %127 : f32 to vector<2x256xf32>
    %130 = vector.broadcast %128 : f32 to vector<2x256xf32>
    %131 = arith.select %55, %129, %130 : vector<2x256xi1>, vector<2x256xf32>
    %132 = vector.extract_strided_slice %35 {offsets = [0, 1], sizes = [2, 256], strides = [1, 1]} : vector<2x358xf32> to vector<2x256xf32>
    %133 = arith.mulf %131, %132 : vector<2x256xf32>
    %134 = arith.addf %126, %133 : vector<2x256xf32>
    %c8 = arith.constant 8 : index
    %135 = memref.load %arg1[%c8] : memref<98xf32, #tpu.memory_space<smem>>
    %c57 = arith.constant 57 : index
    %136 = memref.load %arg1[%c57] : memref<98xf32, #tpu.memory_space<smem>>
    %137 = vector.broadcast %135 : f32 to vector<2x256xf32>
    %138 = vector.broadcast %136 : f32 to vector<2x256xf32>
    %139 = arith.select %55, %137, %138 : vector<2x256xi1>, vector<2x256xf32>
    %140 = vector.extract_strided_slice %35 {offsets = [0, 17], sizes = [2, 256], strides = [1, 1]} : vector<2x358xf32> to vector<2x256xf32>
    %141 = arith.mulf %139, %140 : vector<2x256xf32>
    %142 = arith.addf %134, %141 : vector<2x256xf32>
    %c15 = arith.constant 15 : index
    %143 = memref.load %arg1[%c15] : memref<98xf32, #tpu.memory_space<smem>>
    %c64 = arith.constant 64 : index
    %144 = memref.load %arg1[%c64] : memref<98xf32, #tpu.memory_space<smem>>
    %145 = vector.broadcast %143 : f32 to vector<2x256xf32>
    %146 = vector.broadcast %144 : f32 to vector<2x256xf32>
    %147 = arith.select %55, %145, %146 : vector<2x256xi1>, vector<2x256xf32>
    %148 = vector.extract_strided_slice %35 {offsets = [0, 33], sizes = [2, 256], strides = [1, 1]} : vector<2x358xf32> to vector<2x256xf32>
    %149 = arith.mulf %147, %148 : vector<2x256xf32>
    %150 = arith.addf %142, %149 : vector<2x256xf32>
    %c22 = arith.constant 22 : index
    %151 = memref.load %arg1[%c22] : memref<98xf32, #tpu.memory_space<smem>>
    %c71 = arith.constant 71 : index
    %152 = memref.load %arg1[%c71] : memref<98xf32, #tpu.memory_space<smem>>
    %153 = vector.broadcast %151 : f32 to vector<2x256xf32>
    %154 = vector.broadcast %152 : f32 to vector<2x256xf32>
    %155 = arith.select %55, %153, %154 : vector<2x256xi1>, vector<2x256xf32>
    %156 = vector.extract_strided_slice %35 {offsets = [0, 49], sizes = [2, 256], strides = [1, 1]} : vector<2x358xf32> to vector<2x256xf32>
    %157 = arith.mulf %155, %156 : vector<2x256xf32>
    %158 = arith.addf %150, %157 : vector<2x256xf32>
    %c29 = arith.constant 29 : index
    %159 = memref.load %arg1[%c29] : memref<98xf32, #tpu.memory_space<smem>>
    %c78 = arith.constant 78 : index
    %160 = memref.load %arg1[%c78] : memref<98xf32, #tpu.memory_space<smem>>
    %161 = vector.broadcast %159 : f32 to vector<2x256xf32>
    %162 = vector.broadcast %160 : f32 to vector<2x256xf32>
    %163 = arith.select %55, %161, %162 : vector<2x256xi1>, vector<2x256xf32>
    %164 = vector.extract_strided_slice %35 {offsets = [0, 65], sizes = [2, 256], strides = [1, 1]} : vector<2x358xf32> to vector<2x256xf32>
    %165 = arith.mulf %163, %164 : vector<2x256xf32>
    %166 = arith.addf %158, %165 : vector<2x256xf32>
    %c36 = arith.constant 36 : index
    %167 = memref.load %arg1[%c36] : memref<98xf32, #tpu.memory_space<smem>>
    %c85 = arith.constant 85 : index
    %168 = memref.load %arg1[%c85] : memref<98xf32, #tpu.memory_space<smem>>
    %169 = vector.broadcast %167 : f32 to vector<2x256xf32>
    %170 = vector.broadcast %168 : f32 to vector<2x256xf32>
    %171 = arith.select %55, %169, %170 : vector<2x256xi1>, vector<2x256xf32>
    %172 = vector.extract_strided_slice %35 {offsets = [0, 81], sizes = [2, 256], strides = [1, 1]} : vector<2x358xf32> to vector<2x256xf32>
    %173 = arith.mulf %171, %172 : vector<2x256xf32>
    %174 = arith.addf %166, %173 : vector<2x256xf32>
    %c43 = arith.constant 43 : index
    %175 = memref.load %arg1[%c43] : memref<98xf32, #tpu.memory_space<smem>>
    %c92 = arith.constant 92 : index
    %176 = memref.load %arg1[%c92] : memref<98xf32, #tpu.memory_space<smem>>
    %177 = vector.broadcast %175 : f32 to vector<2x256xf32>
    %178 = vector.broadcast %176 : f32 to vector<2x256xf32>
    %179 = arith.select %55, %177, %178 : vector<2x256xi1>, vector<2x256xf32>
    %180 = vector.extract_strided_slice %35 {offsets = [0, 97], sizes = [2, 256], strides = [1, 1]} : vector<2x358xf32> to vector<2x256xf32>
    %181 = arith.mulf %179, %180 : vector<2x256xf32>
    %182 = arith.addf %174, %181 : vector<2x256xf32>
    %c-2_i32 = arith.constant -2 : i32
    %183 = vector.broadcast %c-2_i32 : i32 to vector<2x256xi32>
    %184 = arith.addi %52, %183 : vector<2x256xi32>
    %c0_i32_37 = arith.constant 0 : i32
    %185 = vector.broadcast %c0_i32_37 : i32 to vector<2x256xi32>
    %186 = arith.cmpi sge, %184, %185 : vector<2x256xi32>
    %c-2_i32_38 = arith.constant -2 : i32
    %187 = vector.broadcast %c-2_i32_38 : i32 to vector<2x256xi32>
    %188 = arith.addi %52, %187 : vector<2x256xi32>
    %c16_i32_39 = arith.constant 16 : i32
    %189 = vector.broadcast %c16_i32_39 : i32 to vector<2x256xi32>
    %190 = arith.cmpi slt, %188, %189 : vector<2x256xi32>
    %191 = arith.andi %186, %190 : vector<2x256xi1>
    %cst_40 = arith.constant 0.000000e+00 : f32
    %192 = vector.broadcast %cst_40 : f32 to vector<2x256xf32>
    %193 = arith.select %191, %182, %192 : vector<2x256xi1>, vector<2x256xf32>
    %194 = arith.addf %125, %193 : vector<2x256xf32>
    %cst_41 = arith.constant 0.000000e+00 : f32
    %195 = vector.broadcast %cst_41 : f32 to vector<2x256xf32>
    %c2 = arith.constant 2 : index
    %196 = memref.load %arg1[%c2] : memref<98xf32, #tpu.memory_space<smem>>
    %c51 = arith.constant 51 : index
    %197 = memref.load %arg1[%c51] : memref<98xf32, #tpu.memory_space<smem>>
    %198 = vector.broadcast %196 : f32 to vector<2x256xf32>
    %199 = vector.broadcast %197 : f32 to vector<2x256xf32>
    %200 = arith.select %55, %198, %199 : vector<2x256xi1>, vector<2x256xf32>
    %201 = vector.extract_strided_slice %35 {offsets = [0, 2], sizes = [2, 256], strides = [1, 1]} : vector<2x358xf32> to vector<2x256xf32>
    %202 = arith.mulf %200, %201 : vector<2x256xf32>
    %203 = arith.addf %195, %202 : vector<2x256xf32>
    %c9 = arith.constant 9 : index
    %204 = memref.load %arg1[%c9] : memref<98xf32, #tpu.memory_space<smem>>
    %c58 = arith.constant 58 : index
    %205 = memref.load %arg1[%c58] : memref<98xf32, #tpu.memory_space<smem>>
    %206 = vector.broadcast %204 : f32 to vector<2x256xf32>
    %207 = vector.broadcast %205 : f32 to vector<2x256xf32>
    %208 = arith.select %55, %206, %207 : vector<2x256xi1>, vector<2x256xf32>
    %209 = vector.extract_strided_slice %35 {offsets = [0, 18], sizes = [2, 256], strides = [1, 1]} : vector<2x358xf32> to vector<2x256xf32>
    %210 = arith.mulf %208, %209 : vector<2x256xf32>
    %211 = arith.addf %203, %210 : vector<2x256xf32>
    %c16 = arith.constant 16 : index
    %212 = memref.load %arg1[%c16] : memref<98xf32, #tpu.memory_space<smem>>
    %c65 = arith.constant 65 : index
    %213 = memref.load %arg1[%c65] : memref<98xf32, #tpu.memory_space<smem>>
    %214 = vector.broadcast %212 : f32 to vector<2x256xf32>
    %215 = vector.broadcast %213 : f32 to vector<2x256xf32>
    %216 = arith.select %55, %214, %215 : vector<2x256xi1>, vector<2x256xf32>
    %217 = vector.extract_strided_slice %35 {offsets = [0, 34], sizes = [2, 256], strides = [1, 1]} : vector<2x358xf32> to vector<2x256xf32>
    %218 = arith.mulf %216, %217 : vector<2x256xf32>
    %219 = arith.addf %211, %218 : vector<2x256xf32>
    %c23 = arith.constant 23 : index
    %220 = memref.load %arg1[%c23] : memref<98xf32, #tpu.memory_space<smem>>
    %c72 = arith.constant 72 : index
    %221 = memref.load %arg1[%c72] : memref<98xf32, #tpu.memory_space<smem>>
    %222 = vector.broadcast %220 : f32 to vector<2x256xf32>
    %223 = vector.broadcast %221 : f32 to vector<2x256xf32>
    %224 = arith.select %55, %222, %223 : vector<2x256xi1>, vector<2x256xf32>
    %225 = vector.extract_strided_slice %35 {offsets = [0, 50], sizes = [2, 256], strides = [1, 1]} : vector<2x358xf32> to vector<2x256xf32>
    %226 = arith.mulf %224, %225 : vector<2x256xf32>
    %227 = arith.addf %219, %226 : vector<2x256xf32>
    %c30 = arith.constant 30 : index
    %228 = memref.load %arg1[%c30] : memref<98xf32, #tpu.memory_space<smem>>
    %c79 = arith.constant 79 : index
    %229 = memref.load %arg1[%c79] : memref<98xf32, #tpu.memory_space<smem>>
    %230 = vector.broadcast %228 : f32 to vector<2x256xf32>
    %231 = vector.broadcast %229 : f32 to vector<2x256xf32>
    %232 = arith.select %55, %230, %231 : vector<2x256xi1>, vector<2x256xf32>
    %233 = vector.extract_strided_slice %35 {offsets = [0, 66], sizes = [2, 256], strides = [1, 1]} : vector<2x358xf32> to vector<2x256xf32>
    %234 = arith.mulf %232, %233 : vector<2x256xf32>
    %235 = arith.addf %227, %234 : vector<2x256xf32>
    %c37 = arith.constant 37 : index
    %236 = memref.load %arg1[%c37] : memref<98xf32, #tpu.memory_space<smem>>
    %c86 = arith.constant 86 : index
    %237 = memref.load %arg1[%c86] : memref<98xf32, #tpu.memory_space<smem>>
    %238 = vector.broadcast %236 : f32 to vector<2x256xf32>
    %239 = vector.broadcast %237 : f32 to vector<2x256xf32>
    %240 = arith.select %55, %238, %239 : vector<2x256xi1>, vector<2x256xf32>
    %241 = vector.extract_strided_slice %35 {offsets = [0, 82], sizes = [2, 256], strides = [1, 1]} : vector<2x358xf32> to vector<2x256xf32>
    %242 = arith.mulf %240, %241 : vector<2x256xf32>
    %243 = arith.addf %235, %242 : vector<2x256xf32>
    %c44 = arith.constant 44 : index
    %244 = memref.load %arg1[%c44] : memref<98xf32, #tpu.memory_space<smem>>
    %c93 = arith.constant 93 : index
    %245 = memref.load %arg1[%c93] : memref<98xf32, #tpu.memory_space<smem>>
    %246 = vector.broadcast %244 : f32 to vector<2x256xf32>
    %247 = vector.broadcast %245 : f32 to vector<2x256xf32>
    %248 = arith.select %55, %246, %247 : vector<2x256xi1>, vector<2x256xf32>
    %249 = vector.extract_strided_slice %35 {offsets = [0, 98], sizes = [2, 256], strides = [1, 1]} : vector<2x358xf32> to vector<2x256xf32>
    %250 = arith.mulf %248, %249 : vector<2x256xf32>
    %251 = arith.addf %243, %250 : vector<2x256xf32>
    %c-1_i32 = arith.constant -1 : i32
    %252 = vector.broadcast %c-1_i32 : i32 to vector<2x256xi32>
    %253 = arith.addi %52, %252 : vector<2x256xi32>
    %c0_i32_42 = arith.constant 0 : i32
    %254 = vector.broadcast %c0_i32_42 : i32 to vector<2x256xi32>
    %255 = arith.cmpi sge, %253, %254 : vector<2x256xi32>
    %c-1_i32_43 = arith.constant -1 : i32
    %256 = vector.broadcast %c-1_i32_43 : i32 to vector<2x256xi32>
    %257 = arith.addi %52, %256 : vector<2x256xi32>
    %c16_i32_44 = arith.constant 16 : i32
    %258 = vector.broadcast %c16_i32_44 : i32 to vector<2x256xi32>
    %259 = arith.cmpi slt, %257, %258 : vector<2x256xi32>
    %260 = arith.andi %255, %259 : vector<2x256xi1>
    %cst_45 = arith.constant 0.000000e+00 : f32
    %261 = vector.broadcast %cst_45 : f32 to vector<2x256xf32>
    %262 = arith.select %260, %251, %261 : vector<2x256xi1>, vector<2x256xf32>
    %263 = arith.addf %194, %262 : vector<2x256xf32>
    %cst_46 = arith.constant 0.000000e+00 : f32
    %264 = vector.broadcast %cst_46 : f32 to vector<2x256xf32>
    %c3 = arith.constant 3 : index
    %265 = memref.load %arg1[%c3] : memref<98xf32, #tpu.memory_space<smem>>
    %c52 = arith.constant 52 : index
    %266 = memref.load %arg1[%c52] : memref<98xf32, #tpu.memory_space<smem>>
    %267 = vector.broadcast %265 : f32 to vector<2x256xf32>
    %268 = vector.broadcast %266 : f32 to vector<2x256xf32>
    %269 = arith.select %55, %267, %268 : vector<2x256xi1>, vector<2x256xf32>
    %270 = vector.extract_strided_slice %35 {offsets = [0, 3], sizes = [2, 256], strides = [1, 1]} : vector<2x358xf32> to vector<2x256xf32>
    %271 = arith.mulf %269, %270 : vector<2x256xf32>
    %272 = arith.addf %264, %271 : vector<2x256xf32>
    %c10 = arith.constant 10 : index
    %273 = memref.load %arg1[%c10] : memref<98xf32, #tpu.memory_space<smem>>
    %c59 = arith.constant 59 : index
    %274 = memref.load %arg1[%c59] : memref<98xf32, #tpu.memory_space<smem>>
    %275 = vector.broadcast %273 : f32 to vector<2x256xf32>
    %276 = vector.broadcast %274 : f32 to vector<2x256xf32>
    %277 = arith.select %55, %275, %276 : vector<2x256xi1>, vector<2x256xf32>
    %278 = vector.extract_strided_slice %35 {offsets = [0, 19], sizes = [2, 256], strides = [1, 1]} : vector<2x358xf32> to vector<2x256xf32>
    %279 = arith.mulf %277, %278 : vector<2x256xf32>
    %280 = arith.addf %272, %279 : vector<2x256xf32>
    %c17 = arith.constant 17 : index
    %281 = memref.load %arg1[%c17] : memref<98xf32, #tpu.memory_space<smem>>
    %c66 = arith.constant 66 : index
    %282 = memref.load %arg1[%c66] : memref<98xf32, #tpu.memory_space<smem>>
    %283 = vector.broadcast %281 : f32 to vector<2x256xf32>
    %284 = vector.broadcast %282 : f32 to vector<2x256xf32>
    %285 = arith.select %55, %283, %284 : vector<2x256xi1>, vector<2x256xf32>
    %286 = vector.extract_strided_slice %35 {offsets = [0, 35], sizes = [2, 256], strides = [1, 1]} : vector<2x358xf32> to vector<2x256xf32>
    %287 = arith.mulf %285, %286 : vector<2x256xf32>
    %288 = arith.addf %280, %287 : vector<2x256xf32>
    %c24 = arith.constant 24 : index
    %289 = memref.load %arg1[%c24] : memref<98xf32, #tpu.memory_space<smem>>
    %c73 = arith.constant 73 : index
    %290 = memref.load %arg1[%c73] : memref<98xf32, #tpu.memory_space<smem>>
    %291 = vector.broadcast %289 : f32 to vector<2x256xf32>
    %292 = vector.broadcast %290 : f32 to vector<2x256xf32>
    %293 = arith.select %55, %291, %292 : vector<2x256xi1>, vector<2x256xf32>
    %294 = vector.extract_strided_slice %35 {offsets = [0, 51], sizes = [2, 256], strides = [1, 1]} : vector<2x358xf32> to vector<2x256xf32>
    %295 = arith.mulf %293, %294 : vector<2x256xf32>
    %296 = arith.addf %288, %295 : vector<2x256xf32>
    %c31 = arith.constant 31 : index
    %297 = memref.load %arg1[%c31] : memref<98xf32, #tpu.memory_space<smem>>
    %c80 = arith.constant 80 : index
    %298 = memref.load %arg1[%c80] : memref<98xf32, #tpu.memory_space<smem>>
    %299 = vector.broadcast %297 : f32 to vector<2x256xf32>
    %300 = vector.broadcast %298 : f32 to vector<2x256xf32>
    %301 = arith.select %55, %299, %300 : vector<2x256xi1>, vector<2x256xf32>
    %302 = vector.extract_strided_slice %35 {offsets = [0, 67], sizes = [2, 256], strides = [1, 1]} : vector<2x358xf32> to vector<2x256xf32>
    %303 = arith.mulf %301, %302 : vector<2x256xf32>
    %304 = arith.addf %296, %303 : vector<2x256xf32>
    %c38 = arith.constant 38 : index
    %305 = memref.load %arg1[%c38] : memref<98xf32, #tpu.memory_space<smem>>
    %c87 = arith.constant 87 : index
    %306 = memref.load %arg1[%c87] : memref<98xf32, #tpu.memory_space<smem>>
    %307 = vector.broadcast %305 : f32 to vector<2x256xf32>
    %308 = vector.broadcast %306 : f32 to vector<2x256xf32>
    %309 = arith.select %55, %307, %308 : vector<2x256xi1>, vector<2x256xf32>
    %310 = vector.extract_strided_slice %35 {offsets = [0, 83], sizes = [2, 256], strides = [1, 1]} : vector<2x358xf32> to vector<2x256xf32>
    %311 = arith.mulf %309, %310 : vector<2x256xf32>
    %312 = arith.addf %304, %311 : vector<2x256xf32>
    %c45 = arith.constant 45 : index
    %313 = memref.load %arg1[%c45] : memref<98xf32, #tpu.memory_space<smem>>
    %c94 = arith.constant 94 : index
    %314 = memref.load %arg1[%c94] : memref<98xf32, #tpu.memory_space<smem>>
    %315 = vector.broadcast %313 : f32 to vector<2x256xf32>
    %316 = vector.broadcast %314 : f32 to vector<2x256xf32>
    %317 = arith.select %55, %315, %316 : vector<2x256xi1>, vector<2x256xf32>
    %318 = vector.extract_strided_slice %35 {offsets = [0, 99], sizes = [2, 256], strides = [1, 1]} : vector<2x358xf32> to vector<2x256xf32>
    %319 = arith.mulf %317, %318 : vector<2x256xf32>
    %320 = arith.addf %312, %319 : vector<2x256xf32>
    %c0_i32_47 = arith.constant 0 : i32
    %321 = vector.broadcast %c0_i32_47 : i32 to vector<2x256xi32>
    %322 = arith.addi %52, %321 : vector<2x256xi32>
    %c0_i32_48 = arith.constant 0 : i32
    %323 = vector.broadcast %c0_i32_48 : i32 to vector<2x256xi32>
    %324 = arith.cmpi sge, %322, %323 : vector<2x256xi32>
    %c0_i32_49 = arith.constant 0 : i32
    %325 = vector.broadcast %c0_i32_49 : i32 to vector<2x256xi32>
    %326 = arith.addi %52, %325 : vector<2x256xi32>
    %c16_i32_50 = arith.constant 16 : i32
    %327 = vector.broadcast %c16_i32_50 : i32 to vector<2x256xi32>
    %328 = arith.cmpi slt, %326, %327 : vector<2x256xi32>
    %329 = arith.andi %324, %328 : vector<2x256xi1>
    %cst_51 = arith.constant 0.000000e+00 : f32
    %330 = vector.broadcast %cst_51 : f32 to vector<2x256xf32>
    %331 = arith.select %329, %320, %330 : vector<2x256xi1>, vector<2x256xf32>
    %332 = arith.addf %263, %331 : vector<2x256xf32>
    %cst_52 = arith.constant 0.000000e+00 : f32
    %333 = vector.broadcast %cst_52 : f32 to vector<2x256xf32>
    %c4 = arith.constant 4 : index
    %334 = memref.load %arg1[%c4] : memref<98xf32, #tpu.memory_space<smem>>
    %c53 = arith.constant 53 : index
    %335 = memref.load %arg1[%c53] : memref<98xf32, #tpu.memory_space<smem>>
    %336 = vector.broadcast %334 : f32 to vector<2x256xf32>
    %337 = vector.broadcast %335 : f32 to vector<2x256xf32>
    %338 = arith.select %55, %336, %337 : vector<2x256xi1>, vector<2x256xf32>
    %339 = vector.extract_strided_slice %35 {offsets = [0, 4], sizes = [2, 256], strides = [1, 1]} : vector<2x358xf32> to vector<2x256xf32>
    %340 = arith.mulf %338, %339 : vector<2x256xf32>
    %341 = arith.addf %333, %340 : vector<2x256xf32>
    %c11 = arith.constant 11 : index
    %342 = memref.load %arg1[%c11] : memref<98xf32, #tpu.memory_space<smem>>
    %c60 = arith.constant 60 : index
    %343 = memref.load %arg1[%c60] : memref<98xf32, #tpu.memory_space<smem>>
    %344 = vector.broadcast %342 : f32 to vector<2x256xf32>
    %345 = vector.broadcast %343 : f32 to vector<2x256xf32>
    %346 = arith.select %55, %344, %345 : vector<2x256xi1>, vector<2x256xf32>
    %347 = vector.extract_strided_slice %35 {offsets = [0, 20], sizes = [2, 256], strides = [1, 1]} : vector<2x358xf32> to vector<2x256xf32>
    %348 = arith.mulf %346, %347 : vector<2x256xf32>
    %349 = arith.addf %341, %348 : vector<2x256xf32>
    %c18 = arith.constant 18 : index
    %350 = memref.load %arg1[%c18] : memref<98xf32, #tpu.memory_space<smem>>
    %c67 = arith.constant 67 : index
    %351 = memref.load %arg1[%c67] : memref<98xf32, #tpu.memory_space<smem>>
    %352 = vector.broadcast %350 : f32 to vector<2x256xf32>
    %353 = vector.broadcast %351 : f32 to vector<2x256xf32>
    %354 = arith.select %55, %352, %353 : vector<2x256xi1>, vector<2x256xf32>
    %355 = vector.extract_strided_slice %35 {offsets = [0, 36], sizes = [2, 256], strides = [1, 1]} : vector<2x358xf32> to vector<2x256xf32>
    %356 = arith.mulf %354, %355 : vector<2x256xf32>
    %357 = arith.addf %349, %356 : vector<2x256xf32>
    %c25 = arith.constant 25 : index
    %358 = memref.load %arg1[%c25] : memref<98xf32, #tpu.memory_space<smem>>
    %c74 = arith.constant 74 : index
    %359 = memref.load %arg1[%c74] : memref<98xf32, #tpu.memory_space<smem>>
    %360 = vector.broadcast %358 : f32 to vector<2x256xf32>
    %361 = vector.broadcast %359 : f32 to vector<2x256xf32>
    %362 = arith.select %55, %360, %361 : vector<2x256xi1>, vector<2x256xf32>
    %363 = vector.extract_strided_slice %35 {offsets = [0, 52], sizes = [2, 256], strides = [1, 1]} : vector<2x358xf32> to vector<2x256xf32>
    %364 = arith.mulf %362, %363 : vector<2x256xf32>
    %365 = arith.addf %357, %364 : vector<2x256xf32>
    %c32 = arith.constant 32 : index
    %366 = memref.load %arg1[%c32] : memref<98xf32, #tpu.memory_space<smem>>
    %c81 = arith.constant 81 : index
    %367 = memref.load %arg1[%c81] : memref<98xf32, #tpu.memory_space<smem>>
    %368 = vector.broadcast %366 : f32 to vector<2x256xf32>
    %369 = vector.broadcast %367 : f32 to vector<2x256xf32>
    %370 = arith.select %55, %368, %369 : vector<2x256xi1>, vector<2x256xf32>
    %371 = vector.extract_strided_slice %35 {offsets = [0, 68], sizes = [2, 256], strides = [1, 1]} : vector<2x358xf32> to vector<2x256xf32>
    %372 = arith.mulf %370, %371 : vector<2x256xf32>
    %373 = arith.addf %365, %372 : vector<2x256xf32>
    %c39 = arith.constant 39 : index
    %374 = memref.load %arg1[%c39] : memref<98xf32, #tpu.memory_space<smem>>
    %c88 = arith.constant 88 : index
    %375 = memref.load %arg1[%c88] : memref<98xf32, #tpu.memory_space<smem>>
    %376 = vector.broadcast %374 : f32 to vector<2x256xf32>
    %377 = vector.broadcast %375 : f32 to vector<2x256xf32>
    %378 = arith.select %55, %376, %377 : vector<2x256xi1>, vector<2x256xf32>
    %379 = vector.extract_strided_slice %35 {offsets = [0, 84], sizes = [2, 256], strides = [1, 1]} : vector<2x358xf32> to vector<2x256xf32>
    %380 = arith.mulf %378, %379 : vector<2x256xf32>
    %381 = arith.addf %373, %380 : vector<2x256xf32>
    %c46 = arith.constant 46 : index
    %382 = memref.load %arg1[%c46] : memref<98xf32, #tpu.memory_space<smem>>
    %c95 = arith.constant 95 : index
    %383 = memref.load %arg1[%c95] : memref<98xf32, #tpu.memory_space<smem>>
    %384 = vector.broadcast %382 : f32 to vector<2x256xf32>
    %385 = vector.broadcast %383 : f32 to vector<2x256xf32>
    %386 = arith.select %55, %384, %385 : vector<2x256xi1>, vector<2x256xf32>
    %387 = vector.extract_strided_slice %35 {offsets = [0, 100], sizes = [2, 256], strides = [1, 1]} : vector<2x358xf32> to vector<2x256xf32>
    %388 = arith.mulf %386, %387 : vector<2x256xf32>
    %389 = arith.addf %381, %388 : vector<2x256xf32>
    %c1_i32_53 = arith.constant 1 : i32
    %390 = vector.broadcast %c1_i32_53 : i32 to vector<2x256xi32>
    %391 = arith.addi %52, %390 : vector<2x256xi32>
    %c0_i32_54 = arith.constant 0 : i32
    %392 = vector.broadcast %c0_i32_54 : i32 to vector<2x256xi32>
    %393 = arith.cmpi sge, %391, %392 : vector<2x256xi32>
    %c1_i32_55 = arith.constant 1 : i32
    %394 = vector.broadcast %c1_i32_55 : i32 to vector<2x256xi32>
    %395 = arith.addi %52, %394 : vector<2x256xi32>
    %c16_i32_56 = arith.constant 16 : i32
    %396 = vector.broadcast %c16_i32_56 : i32 to vector<2x256xi32>
    %397 = arith.cmpi slt, %395, %396 : vector<2x256xi32>
    %398 = arith.andi %393, %397 : vector<2x256xi1>
    %cst_57 = arith.constant 0.000000e+00 : f32
    %399 = vector.broadcast %cst_57 : f32 to vector<2x256xf32>
    %400 = arith.select %398, %389, %399 : vector<2x256xi1>, vector<2x256xf32>
    %401 = arith.addf %332, %400 : vector<2x256xf32>
    %cst_58 = arith.constant 0.000000e+00 : f32
    %402 = vector.broadcast %cst_58 : f32 to vector<2x256xf32>
    %c5 = arith.constant 5 : index
    %403 = memref.load %arg1[%c5] : memref<98xf32, #tpu.memory_space<smem>>
    %c54 = arith.constant 54 : index
    %404 = memref.load %arg1[%c54] : memref<98xf32, #tpu.memory_space<smem>>
    %405 = vector.broadcast %403 : f32 to vector<2x256xf32>
    %406 = vector.broadcast %404 : f32 to vector<2x256xf32>
    %407 = arith.select %55, %405, %406 : vector<2x256xi1>, vector<2x256xf32>
    %408 = vector.extract_strided_slice %35 {offsets = [0, 5], sizes = [2, 256], strides = [1, 1]} : vector<2x358xf32> to vector<2x256xf32>
    %409 = arith.mulf %407, %408 : vector<2x256xf32>
    %410 = arith.addf %402, %409 : vector<2x256xf32>
    %c12 = arith.constant 12 : index
    %411 = memref.load %arg1[%c12] : memref<98xf32, #tpu.memory_space<smem>>
    %c61 = arith.constant 61 : index
    %412 = memref.load %arg1[%c61] : memref<98xf32, #tpu.memory_space<smem>>
    %413 = vector.broadcast %411 : f32 to vector<2x256xf32>
    %414 = vector.broadcast %412 : f32 to vector<2x256xf32>
    %415 = arith.select %55, %413, %414 : vector<2x256xi1>, vector<2x256xf32>
    %416 = vector.extract_strided_slice %35 {offsets = [0, 21], sizes = [2, 256], strides = [1, 1]} : vector<2x358xf32> to vector<2x256xf32>
    %417 = arith.mulf %415, %416 : vector<2x256xf32>
    %418 = arith.addf %410, %417 : vector<2x256xf32>
    %c19 = arith.constant 19 : index
    %419 = memref.load %arg1[%c19] : memref<98xf32, #tpu.memory_space<smem>>
    %c68 = arith.constant 68 : index
    %420 = memref.load %arg1[%c68] : memref<98xf32, #tpu.memory_space<smem>>
    %421 = vector.broadcast %419 : f32 to vector<2x256xf32>
    %422 = vector.broadcast %420 : f32 to vector<2x256xf32>
    %423 = arith.select %55, %421, %422 : vector<2x256xi1>, vector<2x256xf32>
    %424 = vector.extract_strided_slice %35 {offsets = [0, 37], sizes = [2, 256], strides = [1, 1]} : vector<2x358xf32> to vector<2x256xf32>
    %425 = arith.mulf %423, %424 : vector<2x256xf32>
    %426 = arith.addf %418, %425 : vector<2x256xf32>
    %c26 = arith.constant 26 : index
    %427 = memref.load %arg1[%c26] : memref<98xf32, #tpu.memory_space<smem>>
    %c75 = arith.constant 75 : index
    %428 = memref.load %arg1[%c75] : memref<98xf32, #tpu.memory_space<smem>>
    %429 = vector.broadcast %427 : f32 to vector<2x256xf32>
    %430 = vector.broadcast %428 : f32 to vector<2x256xf32>
    %431 = arith.select %55, %429, %430 : vector<2x256xi1>, vector<2x256xf32>
    %432 = vector.extract_strided_slice %35 {offsets = [0, 53], sizes = [2, 256], strides = [1, 1]} : vector<2x358xf32> to vector<2x256xf32>
    %433 = arith.mulf %431, %432 : vector<2x256xf32>
    %434 = arith.addf %426, %433 : vector<2x256xf32>
    %c33 = arith.constant 33 : index
    %435 = memref.load %arg1[%c33] : memref<98xf32, #tpu.memory_space<smem>>
    %c82 = arith.constant 82 : index
    %436 = memref.load %arg1[%c82] : memref<98xf32, #tpu.memory_space<smem>>
    %437 = vector.broadcast %435 : f32 to vector<2x256xf32>
    %438 = vector.broadcast %436 : f32 to vector<2x256xf32>
    %439 = arith.select %55, %437, %438 : vector<2x256xi1>, vector<2x256xf32>
    %440 = vector.extract_strided_slice %35 {offsets = [0, 69], sizes = [2, 256], strides = [1, 1]} : vector<2x358xf32> to vector<2x256xf32>
    %441 = arith.mulf %439, %440 : vector<2x256xf32>
    %442 = arith.addf %434, %441 : vector<2x256xf32>
    %c40 = arith.constant 40 : index
    %443 = memref.load %arg1[%c40] : memref<98xf32, #tpu.memory_space<smem>>
    %c89 = arith.constant 89 : index
    %444 = memref.load %arg1[%c89] : memref<98xf32, #tpu.memory_space<smem>>
    %445 = vector.broadcast %443 : f32 to vector<2x256xf32>
    %446 = vector.broadcast %444 : f32 to vector<2x256xf32>
    %447 = arith.select %55, %445, %446 : vector<2x256xi1>, vector<2x256xf32>
    %448 = vector.extract_strided_slice %35 {offsets = [0, 85], sizes = [2, 256], strides = [1, 1]} : vector<2x358xf32> to vector<2x256xf32>
    %449 = arith.mulf %447, %448 : vector<2x256xf32>
    %450 = arith.addf %442, %449 : vector<2x256xf32>
    %c47 = arith.constant 47 : index
    %451 = memref.load %arg1[%c47] : memref<98xf32, #tpu.memory_space<smem>>
    %c96 = arith.constant 96 : index
    %452 = memref.load %arg1[%c96] : memref<98xf32, #tpu.memory_space<smem>>
    %453 = vector.broadcast %451 : f32 to vector<2x256xf32>
    %454 = vector.broadcast %452 : f32 to vector<2x256xf32>
    %455 = arith.select %55, %453, %454 : vector<2x256xi1>, vector<2x256xf32>
    %456 = vector.extract_strided_slice %35 {offsets = [0, 101], sizes = [2, 256], strides = [1, 1]} : vector<2x358xf32> to vector<2x256xf32>
    %457 = arith.mulf %455, %456 : vector<2x256xf32>
    %458 = arith.addf %450, %457 : vector<2x256xf32>
    %c2_i32 = arith.constant 2 : i32
    %459 = vector.broadcast %c2_i32 : i32 to vector<2x256xi32>
    %460 = arith.addi %52, %459 : vector<2x256xi32>
    %c0_i32_59 = arith.constant 0 : i32
    %461 = vector.broadcast %c0_i32_59 : i32 to vector<2x256xi32>
    %462 = arith.cmpi sge, %460, %461 : vector<2x256xi32>
    %c2_i32_60 = arith.constant 2 : i32
    %463 = vector.broadcast %c2_i32_60 : i32 to vector<2x256xi32>
    %464 = arith.addi %52, %463 : vector<2x256xi32>
    %c16_i32_61 = arith.constant 16 : i32
    %465 = vector.broadcast %c16_i32_61 : i32 to vector<2x256xi32>
    %466 = arith.cmpi slt, %464, %465 : vector<2x256xi32>
    %467 = arith.andi %462, %466 : vector<2x256xi1>
    %cst_62 = arith.constant 0.000000e+00 : f32
    %468 = vector.broadcast %cst_62 : f32 to vector<2x256xf32>
    %469 = arith.select %467, %458, %468 : vector<2x256xi1>, vector<2x256xf32>
    %470 = arith.addf %401, %469 : vector<2x256xf32>
    %cst_63 = arith.constant 0.000000e+00 : f32
    %471 = vector.broadcast %cst_63 : f32 to vector<2x256xf32>
    %c6 = arith.constant 6 : index
    %472 = memref.load %arg1[%c6] : memref<98xf32, #tpu.memory_space<smem>>
    %c55 = arith.constant 55 : index
    %473 = memref.load %arg1[%c55] : memref<98xf32, #tpu.memory_space<smem>>
    %474 = vector.broadcast %472 : f32 to vector<2x256xf32>
    %475 = vector.broadcast %473 : f32 to vector<2x256xf32>
    %476 = arith.select %55, %474, %475 : vector<2x256xi1>, vector<2x256xf32>
    %477 = vector.extract_strided_slice %35 {offsets = [0, 6], sizes = [2, 256], strides = [1, 1]} : vector<2x358xf32> to vector<2x256xf32>
    %478 = arith.mulf %476, %477 : vector<2x256xf32>
    %479 = arith.addf %471, %478 : vector<2x256xf32>
    %c13 = arith.constant 13 : index
    %480 = memref.load %arg1[%c13] : memref<98xf32, #tpu.memory_space<smem>>
    %c62 = arith.constant 62 : index
    %481 = memref.load %arg1[%c62] : memref<98xf32, #tpu.memory_space<smem>>
    %482 = vector.broadcast %480 : f32 to vector<2x256xf32>
    %483 = vector.broadcast %481 : f32 to vector<2x256xf32>
    %484 = arith.select %55, %482, %483 : vector<2x256xi1>, vector<2x256xf32>
    %485 = vector.extract_strided_slice %35 {offsets = [0, 22], sizes = [2, 256], strides = [1, 1]} : vector<2x358xf32> to vector<2x256xf32>
    %486 = arith.mulf %484, %485 : vector<2x256xf32>
    %487 = arith.addf %479, %486 : vector<2x256xf32>
    %c20 = arith.constant 20 : index
    %488 = memref.load %arg1[%c20] : memref<98xf32, #tpu.memory_space<smem>>
    %c69 = arith.constant 69 : index
    %489 = memref.load %arg1[%c69] : memref<98xf32, #tpu.memory_space<smem>>
    %490 = vector.broadcast %488 : f32 to vector<2x256xf32>
    %491 = vector.broadcast %489 : f32 to vector<2x256xf32>
    %492 = arith.select %55, %490, %491 : vector<2x256xi1>, vector<2x256xf32>
    %493 = vector.extract_strided_slice %35 {offsets = [0, 38], sizes = [2, 256], strides = [1, 1]} : vector<2x358xf32> to vector<2x256xf32>
    %494 = arith.mulf %492, %493 : vector<2x256xf32>
    %495 = arith.addf %487, %494 : vector<2x256xf32>
    %c27 = arith.constant 27 : index
    %496 = memref.load %arg1[%c27] : memref<98xf32, #tpu.memory_space<smem>>
    %c76 = arith.constant 76 : index
    %497 = memref.load %arg1[%c76] : memref<98xf32, #tpu.memory_space<smem>>
    %498 = vector.broadcast %496 : f32 to vector<2x256xf32>
    %499 = vector.broadcast %497 : f32 to vector<2x256xf32>
    %500 = arith.select %55, %498, %499 : vector<2x256xi1>, vector<2x256xf32>
    %501 = vector.extract_strided_slice %35 {offsets = [0, 54], sizes = [2, 256], strides = [1, 1]} : vector<2x358xf32> to vector<2x256xf32>
    %502 = arith.mulf %500, %501 : vector<2x256xf32>
    %503 = arith.addf %495, %502 : vector<2x256xf32>
    %c34 = arith.constant 34 : index
    %504 = memref.load %arg1[%c34] : memref<98xf32, #tpu.memory_space<smem>>
    %c83 = arith.constant 83 : index
    %505 = memref.load %arg1[%c83] : memref<98xf32, #tpu.memory_space<smem>>
    %506 = vector.broadcast %504 : f32 to vector<2x256xf32>
    %507 = vector.broadcast %505 : f32 to vector<2x256xf32>
    %508 = arith.select %55, %506, %507 : vector<2x256xi1>, vector<2x256xf32>
    %509 = vector.extract_strided_slice %35 {offsets = [0, 70], sizes = [2, 256], strides = [1, 1]} : vector<2x358xf32> to vector<2x256xf32>
    %510 = arith.mulf %508, %509 : vector<2x256xf32>
    %511 = arith.addf %503, %510 : vector<2x256xf32>
    %c41 = arith.constant 41 : index
    %512 = memref.load %arg1[%c41] : memref<98xf32, #tpu.memory_space<smem>>
    %c90 = arith.constant 90 : index
    %513 = memref.load %arg1[%c90] : memref<98xf32, #tpu.memory_space<smem>>
    %514 = vector.broadcast %512 : f32 to vector<2x256xf32>
    %515 = vector.broadcast %513 : f32 to vector<2x256xf32>
    %516 = arith.select %55, %514, %515 : vector<2x256xi1>, vector<2x256xf32>
    %517 = vector.extract_strided_slice %35 {offsets = [0, 86], sizes = [2, 256], strides = [1, 1]} : vector<2x358xf32> to vector<2x256xf32>
    %518 = arith.mulf %516, %517 : vector<2x256xf32>
    %519 = arith.addf %511, %518 : vector<2x256xf32>
    %c48 = arith.constant 48 : index
    %520 = memref.load %arg1[%c48] : memref<98xf32, #tpu.memory_space<smem>>
    %c97 = arith.constant 97 : index
    %521 = memref.load %arg1[%c97] : memref<98xf32, #tpu.memory_space<smem>>
    %522 = vector.broadcast %520 : f32 to vector<2x256xf32>
    %523 = vector.broadcast %521 : f32 to vector<2x256xf32>
    %524 = arith.select %55, %522, %523 : vector<2x256xi1>, vector<2x256xf32>
    %525 = vector.extract_strided_slice %35 {offsets = [0, 102], sizes = [2, 256], strides = [1, 1]} : vector<2x358xf32> to vector<2x256xf32>
    %526 = arith.mulf %524, %525 : vector<2x256xf32>
    %527 = arith.addf %519, %526 : vector<2x256xf32>
    %c3_i32 = arith.constant 3 : i32
    %528 = vector.broadcast %c3_i32 : i32 to vector<2x256xi32>
    %529 = arith.addi %52, %528 : vector<2x256xi32>
    %c0_i32_64 = arith.constant 0 : i32
    %530 = vector.broadcast %c0_i32_64 : i32 to vector<2x256xi32>
    %531 = arith.cmpi sge, %529, %530 : vector<2x256xi32>
    %c3_i32_65 = arith.constant 3 : i32
    %532 = vector.broadcast %c3_i32_65 : i32 to vector<2x256xi32>
    %533 = arith.addi %52, %532 : vector<2x256xi32>
    %c16_i32_66 = arith.constant 16 : i32
    %534 = vector.broadcast %c16_i32_66 : i32 to vector<2x256xi32>
    %535 = arith.cmpi slt, %533, %534 : vector<2x256xi32>
    %536 = arith.andi %531, %535 : vector<2x256xi1>
    %cst_67 = arith.constant 0.000000e+00 : f32
    %537 = vector.broadcast %cst_67 : f32 to vector<2x256xf32>
    %538 = arith.select %536, %527, %537 : vector<2x256xi1>, vector<2x256xf32>
    %539 = arith.addf %470, %538 : vector<2x256xf32>
    %cst_68 = arith.constant dense<0.000000e+00> : vector<256xf32>
    %540 = vector.multi_reduction <add>, %539, %cst_68 [0] : vector<2x256xf32> to vector<256xf32>
    %541 = vector.shape_cast %540 : vector<256xf32> to vector<1x256xf32>
    %cst_69 = arith.constant 5.000000e-01 : f32
    %542 = vector.broadcast %cst_69 : f32 to vector<1x256xf32>
    %543 = arith.mulf %542, %541 : vector<1x256xf32>
    %544 = math.tanh %543 : vector<1x256xf32>
    %cst_70 = arith.constant 1.000000e+00 : f32
    %545 = vector.broadcast %cst_70 : f32 to vector<1x256xf32>
    %546 = arith.addf %544, %545 : vector<1x256xf32>
    %cst_71 = arith.constant 5.000000e-01 : f32
    %547 = vector.broadcast %cst_71 : f32 to vector<1x256xf32>
    %548 = arith.mulf %547, %546 : vector<1x256xf32>
    %c0_72 = arith.constant 0 : index
    %c0_73 = arith.constant 0 : index
    %c0_74 = arith.constant 0 : index
    %549 = vector.load %arg5[%c0_72, %c0_73, %c0_74] : memref<1x32x256xf32, #tpu.memory_space<vmem>>, vector<1x32x256xf32>
    %550 = vector.shape_cast %549 : vector<1x32x256xf32> to vector<32x256xf32>
    %551 = vector.broadcast %548 : vector<1x256xf32> to vector<32x256xf32>
    %552 = arith.mulf %550, %551 : vector<32x256xf32>
    %c0_75 = arith.constant 0 : index
    %c0_76 = arith.constant 0 : index
    %c0_77 = arith.constant 0 : index
    %553 = vector.load %arg5[%c0_75, %c0_76, %c0_77] : memref<1x32x256xf32, #tpu.memory_space<vmem>>, vector<1x32x256xf32>
    %554 = vector.shape_cast %553 : vector<1x32x256xf32> to vector<32x256xf32>
    %555 = vector.shape_cast %552 : vector<32x256xf32> to vector<1x32x256xf32>
    tpu.vector_store %arg5[%c0_75, %c0_76, %c0_77], %555 {strides = array<i32>} : memref<1x32x256xf32, #tpu.memory_space<vmem>>, vector<1x32x256xf32>,
    return
  }
  func.func @transform_0(%arg0: i32) -> i32 {
    %c0_i32 = arith.constant 0 : i32
    %c0_i32_0 = arith.constant 0 : i32
    return %c0_i32 : i32
  }
  func.func @transform_1(%arg0: i32) -> (i32, i32, i32) {
    %c0_i32 = arith.constant 0 : i32
    %c0_i32_0 = arith.constant 0 : i32
    %c0_i32_1 = arith.constant 0 : i32
    return %arg0, %c0_i32, %c0_i32_0 : i32, i32, i32
  }
  func.func @transform_2(%arg0: i32) -> (i32, i32) {
    %c0_i32 = arith.constant 0 : i32
    %c0_i32_0 = arith.constant 0 : i32
    %c0_i32_1 = arith.constant 0 : i32
    return %c0_i32, %c0_i32_0 : i32, i32
  }
  func.func @transform_3(%arg0: i32) -> (i32, i32) {
    %c0_i32 = arith.constant 0 : i32
    %c0_i32_0 = arith.constant 0 : i32
    %c0_i32_1 = arith.constant 0 : i32
    return %c0_i32, %c0_i32_0 : i32, i32
  }
  func.func @transform_4(%arg0: i32) -> (i32, i32, i32) {
    %c0_i32 = arith.constant 0 : i32
    %c0_i32_0 = arith.constant 0 : i32
    %c0_i32_1 = arith.constant 0 : i32
    return %arg0, %c0_i32, %c0_i32_0 : i32, i32, i32
  }
}

</mosaic_0001>

<llo_original>
// kernel: tpu_custom_call.1
$region0: #{tpu_custom_call.1}
  #allocation0 [shape = 'u32[]', space=smem, size = 0x4, offset = 0x4, fixed_abs, tag = 'smem constant byte address 0x4 - core index']
  #allocation1 [shape = 'u32[144,128]{1,0:T(1,128)}', space=vmem, size = 0x12000, scoped, tag = 'internal scratch']
  %s0 = inlined_call_operand.vmem [shape: f32[98], index: 0, kind: input, shape index: {}]
  %s1 = inlined_call_operand.hbm [shape: f32[2,32,256], index: 1, kind: input, shape index: {}]
  %s2 = inlined_call_operand.vmem [shape: f32[2,32], index: 2, kind: input, shape index: {}]
  %s3 = inlined_call_operand.vmem [shape: f32[32,2], index: 3, kind: input, shape index: {}]
  %s4 = inlined_call_operand.hbm [shape: f32[2,32,256], index: 4, kind: output, shape index: {}]
  %s5 = sld [smem:[#allocation0]]
  $region57: #{tpu_custom_call.1} parent=0
    _
  %s7 = ssub.s32 1, %s5
  %s8 = scalar_select 0, %s7, %s5
  $region1: #{tpu_custom_call.1} parent=0
    #allocation2 [shape = 'u8[512]{0}', space=smem, size = 0x200, scoped, tag = 'input window, operand 0, single buffered']
    #allocation3 [shape = 's32[2]{0}', space=sflag, size = 0x8, scoped, tag = 'scoped memory for tpu_custom_call.1']
    #allocation4 [shape = 's32[2]{0}', space=sflag, size = 0x8, scoped, tag = 'scoped memory for tpu_custom_call.1']
    #allocation5 [shape = 's32[2]{0}', space=sflag, size = 0x8, scoped, tag = 'scoped memory for tpu_custom_call.1']
    #allocation6 [shape = 'u8[65536]{0}', space=vmem, size = 0x10000, scoped, tag = 'input window, operand 1']
    #allocation7 [shape = 'u8[65536]{0}', space=vmem, size = 0x10000, scoped, tag = 'output window, operand 0']
    %9 = vsyncpa [#allocation5], 0
    %10 = vsyncpa [#allocation3], 0
    %s11 = scalar_lea.sflag [#allocation3], 1
    %12 = vsyncpa %s11, 0
    %13 = vsyncpa [#allocation4], 0
    %s14 = scalar_lea.sflag [#allocation4], 1
    %15 = vsyncpa %s14, 0
    loop: start=0, step=1, limit=4
    $region2: #{tpu_custom_call.1} parent=1 // loop_pre_header
      _
    $region3: #{tpu_custom_call.1} parent=1 // loop_header
      %s17 = sphi 0, %s21
      %p18 = scmp.ge.s32.totalorder %s17, 4
      %s25 = sphi 0, %s25
      %s27 = sphi 0, %s25
      %s28 = sphi 0, %s27
      %s42 = sphi 0, %s28
      %s48 = sphi 0, %s50
      %s51 = sphi 0, %s48
      %s52 = sphi 0, %s51
      %s68 = sphi 0, %s52
      %s72 = sphi 0, %s72
      %s74 = sphi 0, %s72
      %s75 = sphi 0, %s74
      %s89 = sphi 0, %s75
      %s93 = sphi 0, %s93
      %s95 = sphi 0, %s93
      %s96 = sphi 0, %s95
      %s110 = sphi 0, %s96
      %s116 = sphi 0, %s118
      %s119 = sphi 0, %s116
      %s120 = sphi 0, %s119
      %s136 = sphi 0, %s120
    $region4: #{tpu_custom_call.1} parent=1 // loop_header_branch
      %20 = sbr.rel (%p18) target = $region8
    $region5: #{tpu_custom_call.1} parent=1 // loop_body
      %s22 = ssub.s32 %s17, 1
      %s23 = ssub.s32 %s17, 2
      %s24 = sadd.s32 %s17, 1
      %s26 = sadd.s32 %s25, 1
      %p29 = scmp.eq.s32.totalorder %s17, 1
      %p30 = scmp.ne.s32.totalorder %s25, %s27
      %p31 = scmp.eq.s32.totalorder %s17, 0
      %p32 = por %p30, %p31
      %p33 = scmp.ne.s32.totalorder %s25, %s27
      %p34 = scmp.eq.s32.totalorder %s22, 1
      %p35 = por %p33, %p34
      %p36 = scmp.ne.s32.totalorder %s27, %s28
      %p37 = scmp.eq.s32.totalorder %s22, 0
      %p38 = por %p36, %p37
      %p39 = scmp.ne.s32.totalorder %s27, %s28
      %p40 = scmp.eq.s32.totalorder %s23, 1
      %p41 = por %p39, %p40
      %p43 = scmp.ne.s32.totalorder %s28, %s42
      %p44 = scmp.eq.s32.totalorder %s23, 0
      %p45 = por %p43, %p44
      %s46 = ssub.s32 %s17, %s24
      %p47 = scmp.eq.s32.totalorder %s46, 0
      %s49 = sadd.s32 %s48, 1
      %s50 = scalar_select %p47, %s48, %s49
      %p53 = pneg %p47
      %p54 = scmp.eq.s32.totalorder %s17, 1
      %p55 = por %p53, %p54
      %p56 = scmp.ne.s32.totalorder %s48, %s51
      %p57 = scmp.eq.s32.totalorder %s17, 0
      %p58 = por %p56, %p57
      %p59 = scmp.ne.s32.totalorder %s48, %s51
      %p60 = scmp.eq.s32.totalorder %s22, 1
      %p61 = por %p59, %p60
      %p62 = scmp.ne.s32.totalorder %s51, %s52
      %p63 = scmp.eq.s32.totalorder %s22, 0
      %p64 = por %p62, %p63
      %p65 = scmp.ne.s32.totalorder %s51, %s52
      %p66 = scmp.eq.s32.totalorder %s23, 1
      %p67 = por %p65, %p66
      %p69 = scmp.ne.s32.totalorder %s52, %s68
      %p70 = scmp.eq.s32.totalorder %s23, 0
      %p71 = por %p69, %p70
      %s73 = sadd.s32 %s72, 1
      %p76 = scmp.eq.s32.totalorder %s17, 1
      %p77 = scmp.ne.s32.totalorder %s72, %s74
      %p78 = scmp.eq.s32.totalorder %s17, 0
      %p79 = por %p77, %p78
      %p80 = scmp.ne.s32.totalorder %s72, %s74
      %p81 = scmp.eq.s32.totalorder %s22, 1
      %p82 = por %p80, %p81
      %p83 = scmp.ne.s32.totalorder %s74, %s75
      %p84 = scmp.eq.s32.totalorder %s22, 0
      %p85 = por %p83, %p84
      %p86 = scmp.ne.s32.totalorder %s74, %s75
      %p87 = scmp.eq.s32.totalorder %s23, 1
      %p88 = por %p86, %p87
      %p90 = scmp.ne.s32.totalorder %s75, %s89
      %p91 = scmp.eq.s32.totalorder %s23, 0
      %p92 = por %p90, %p91
      %s94 = sadd.s32 %s93, 1
      %p97 = scmp.eq.s32.totalorder %s17, 1
      %p98 = scmp.ne.s32.totalorder %s93, %s95
      %p99 = scmp.eq.s32.totalorder %s17, 0
      %p100 = por %p98, %p99
      %p101 = scmp.ne.s32.totalorder %s93, %s95
      %p102 = scmp.eq.s32.totalorder %s22, 1
      %p103 = por %p101, %p102
      %p104 = scmp.ne.s32.totalorder %s95, %s96
      %p105 = scmp.eq.s32.totalorder %s22, 0
      %p106 = por %p104, %p105
      %p107 = scmp.ne.s32.totalorder %s95, %s96
      %p108 = scmp.eq.s32.totalorder %s23, 1
      %p109 = por %p107, %p108
      %p111 = scmp.ne.s32.totalorder %s96, %s110
      %p112 = scmp.eq.s32.totalorder %s23, 0
      %p113 = por %p111, %p112
      %s114 = ssub.s32 %s17, %s24
      %p115 = scmp.eq.s32.totalorder %s114, 0
      %s117 = sadd.s32 %s116, 1
      %s118 = scalar_select %p115, %s116, %s117
      %p121 = pneg %p115
      %p122 = scmp.eq.s32.totalorder %s17, 1
      %p123 = por %p121, %p122
      %p124 = scmp.ne.s32.totalorder %s116, %s119
      %p125 = scmp.eq.s32.totalorder %s17, 0
      %p126 = por %p124, %p125
      %p127 = scmp.ne.s32.totalorder %s116, %s119
      %p128 = scmp.eq.s32.totalorder %s22, 1
      %p129 = por %p127, %p128
      %p130 = scmp.ne.s32.totalorder %s119, %s120
      %p131 = scmp.eq.s32.totalorder %s22, 0
      %p132 = por %p130, %p131
      %p133 = scmp.ne.s32.totalorder %s119, %s120
      %p134 = scmp.eq.s32.totalorder %s23, 1
      %p135 = por %p133, %p134
      %p137 = scmp.ne.s32.totalorder %s120, %s136
      %p138 = scmp.eq.s32.totalorder %s23, 0
      %p139 = por %p137, %p138
      %p140 = scmp.le.s32.totalorder 1, %s17
      %p141 = scmp.lt.s32.totalorder %s17, 3
      %p142 = pnand %p140, %p141
      %p143 = pneg %p142
      // Predicated region
      $region9: #{tpu_custom_call.1} parent=5 // pred_check
        _
      $region10: #{tpu_custom_call.1} parent=5 // pred_check_branch
        %145 = sbr.rel (%p142) target = $region12
      $region11: #{tpu_custom_call.1} parent=5 // pred_region
        %s146 = ssub.s32 %s17, 1
        // Predicated region
        $region13: #{tpu_custom_call.1} parent=11 // pred_check
          %p147 = pneg %p38
        $region14: #{tpu_custom_call.1} parent=11 // pred_check_branch
          %149 = sbr.rel (%p147) target = $region16
        $region15: #{tpu_custom_call.1} parent=11 // pred_region
          %s151 = ssub.s32 16, 16
          %152 = vsyncadd [#allocation5], %s151
          %s154 = sshll.u32 %s0, 4
          %s155 = int_to_ptr.vmem [resolvable:$true] %s154
          %157 = dma.vmem_to_smem %s155, 16, [#allocation2], [#allocation5]
        $region16: #{tpu_custom_call.1} parent=11 // pred_fallthru
          _
        // Predicated region
        $region17: #{tpu_custom_call.1} parent=11 // pred_check
          %p158 = pneg %p85
        $region18: #{tpu_custom_call.1} parent=11 // pred_check_branch
          %160 = sbr.rel (%p158) target = $region20
        $region19: #{tpu_custom_call.1} parent=11 // pred_region
          _
        $region20: #{tpu_custom_call.1} parent=11 // pred_fallthru
          _
        // Predicated region
        $region21: #{tpu_custom_call.1} parent=11 // pred_check
          %p161 = pneg %p106
        $region22: #{tpu_custom_call.1} parent=11 // pred_check_branch
          %163 = sbr.rel (%p161) target = $region24
        $region23: #{tpu_custom_call.1} parent=11 // pred_region
          _
        $region24: #{tpu_custom_call.1} parent=11 // pred_fallthru
          _
      $region12: #{tpu_custom_call.1} parent=5 // pred_fallthru
        _
      %p164 = scmp.lt.s32.totalorder %s17, 2
      // Predicated region
      $region25: #{tpu_custom_call.1} parent=5 // pred_check
        %p165 = pneg %p164
      $region26: #{tpu_custom_call.1} parent=5 // pred_check_branch
        %167 = sbr.rel (%p165) target = $region28
      $region27: #{tpu_custom_call.1} parent=5 // pred_region
        // Predicated region
        $region29: #{tpu_custom_call.1} parent=27 // pred_check
          %p168 = pneg %p58
        $region30: #{tpu_custom_call.1} parent=27 // pred_check_branch
          %170 = sbr.rel (%p168) target = $region32
        $region31: #{tpu_custom_call.1} parent=27 // pred_region
          %s171 = sand.u32 %s48, 1
          %s172 = scalar_lea.sflag [#allocation3], %s171
          %s173 = sand.u32 %s48, 1
          %s174 = smul.addr %s173, 64
          %s175 = scalar_lea.vmem [#allocation6], %s174
          %s177 = ssub.s32 1024, 1024
          %178 = vsyncadd %s172, %s177
          %s179 = smul.addr %s17, 8
          %s180 = smul.addr %s179, 128
          %s181 = scalar_lea.hbm %s1, %s180
          %s182 = sshll.u32 %s175, 4
          %s183 = int_to_ptr.vmem [resolvable:$true] %s182
          %188 = dma.hbm_to_vmem [thread:$0]  %s181, 1024, %s183, %s172, 256, 256, 16
        $region32: #{tpu_custom_call.1} parent=27 // pred_fallthru
          _
      $region28: #{tpu_custom_call.1} parent=5 // pred_fallthru
        _
      %p189 = scmp.le.s32.totalorder 1, %s17
      %p190 = scmp.lt.s32.totalorder %s17, 3
      %p191 = pnand %p189, %p190
      %p192 = pneg %p191
      // Predicated region
      $region33: #{tpu_custom_call.1} parent=5 // pred_check
        _
      $region34: #{tpu_custom_call.1} parent=5 // pred_check_branch
        %194 = sbr.rel (%p191) target = $region36
      $region35: #{tpu_custom_call.1} parent=5 // pred_region
        %s195 = ssub.s32 %s17, 1
        // Predicated region
        $region37: #{tpu_custom_call.1} parent=35 // pred_check
          %p196 = pneg %p38
        $region38: #{tpu_custom_call.1} parent=35 // pred_check_branch
          %198 = sbr.rel (%p196) target = $region40
        $region39: #{tpu_custom_call.1} parent=35 // pred_region
          %199 = dma.done [#allocation5], 16
        $region40: #{tpu_custom_call.1} parent=35 // pred_fallthru
          _
        %s200 = sand.u32 %s51, 1
        %s201 = scalar_lea.sflag [#allocation3], %s200
        %s202 = sand.u32 %s51, 1
        %s203 = smul.addr %s202, 64
        %s204 = scalar_lea.vmem [#allocation6], %s203
        // Predicated region
        $region41: #{tpu_custom_call.1} parent=35 // pred_check
          %p205 = pneg %p64
        $region42: #{tpu_custom_call.1} parent=35 // pred_check_branch
          %207 = sbr.rel (%p205) target = $region44
        $region43: #{tpu_custom_call.1} parent=35 // pred_region
          %208 = dma.done %s201, 1024
        $region44: #{tpu_custom_call.1} parent=35 // pred_fallthru
          _
        %209 = sfence
        %p210 = pneg %p38
        %p211 = pneg %p35
        %s212 = sand.u32 %s51, 1
        %s213 = scalar_lea.sflag [#allocation3], %s212
        %s214 = sand.u32 %s51, 1
        %s215 = smul.addr %s214, 64
        %s216 = scalar_lea.vmem [#allocation6], %s215
        %p217 = pneg %p64
        %p218 = pneg %p61
        %p219 = pneg %p85
        %p220 = pneg %p82
        %p221 = pneg %p106
        %p222 = pneg %p103
        %p223 = pneg %p132
        %p224 = pneg %p129
        %s225 = sand.u32 %s119, 1
        %s226 = scalar_lea.sflag [#allocation4], %s225
        %s227 = sand.u32 %s119, 1
        %s228 = smul.addr %s227, 64
        %s229 = scalar_lea.vmem [#allocation7], %s228
        %v230 = vld [vmem:[%s204] sm:$0xff]
        %v231 = vld [vmem:[%s204 + $0x8] sm:$0xff]
        %v232 = vld [vmem:[%s204 + $0x10] sm:$0xff]
        %v233 = vld [vmem:[%s204 + $0x18] sm:$0xff]
        %v234 = vld [vmem:[%s204 + $0x20] sm:$0xff]
        %v235 = vld [vmem:[%s204 + $0x28] sm:$0xff]
        %v236 = vld [vmem:[%s204 + $0x30] sm:$0xff]
        %v237 = vld [vmem:[%s204 + $0x38] sm:$0xff]
        %238 = vmatprep.subr.mxu0 0.0
        %239 = vmatpush1.msra.mxu0 0.00390625
        %240 = vmatprep.subr.mxu0 0.0
        %241 = vmatpush1.msra.mxu0 0.00390625
        %242 = vmatprep.subr.mxu0 0.0
        %243 = vmatpush1.msra.mxu0 0.00390625
        %244 = vmatprep.subr.mxu0 0.0
        %245 = vmatpush1.msra.mxu0 0.00390625
        %246 = vmatprep.subr.mxu0 0.0
        %247 = vmatpush1.msra.mxu0 0.00390625
        %248 = vmatprep.subr.mxu0 0.0
        %249 = vmatpush1.msra.mxu0 0.00390625
        %250 = vmatprep.subr.mxu0 0.0
        %251 = vmatpush1.msra.mxu0 0.00390625
        %252 = vmatprep.subr.mxu0 0.0
        %253 = vmatpush1.msra.mxu0 0.00390625
        %254 = vmatprep.subr.mxu0 0.0
        %255 = vmatpush1.msra.mxu0 0.00390625
        %256 = vmatprep.subr.mxu0 0.0
        %257 = vmatpush1.msra.mxu0 0.00390625
        %258 = vmatprep.subr.mxu0 0.0
        %259 = vmatpush1.msra.mxu0 0.00390625
        %260 = vmatprep.subr.mxu0 0.0
        %261 = vmatpush1.msra.mxu0 0.00390625
        %262 = vmatprep.subr.mxu0 0.0
        %263 = vmatpush1.msra.mxu0 0.00390625
        %264 = vmatprep.subr.mxu0 0.0
        %265 = vmatpush1.msra.mxu0 0.00390625
        %266 = vmatprep.subr.mxu0 0.0
        %267 = vmatpush1.msra.mxu0 0.00390625
        %268 = vmatprep.subr.mxu0 0.0
        %269 = vmatpush1.msra.mxu0 0.00390625
        %270 = vmatprep.subr.mxu0 0.0
        %271 = vmatpush1.msra.mxu0 0.00390625
        %272 = vmatprep.subr.mxu0 0.0
        %273 = vmatpush1.msra.mxu0 0.00390625
        %274 = vmatprep.subr.mxu0 0.0
        %275 = vmatpush1.msra.mxu0 0.00390625
        %276 = vmatprep.subr.mxu0 0.0
        %277 = vmatpush1.msra.mxu0 0.00390625
        %278 = vmatprep.subr.mxu0 0.0
        %279 = vmatpush1.msra.mxu0 0.00390625
        %280 = vmatprep.subr.mxu0 0.0
        %281 = vmatpush1.msra.mxu0 0.00390625
        %282 = vmatprep.subr.mxu0 0.0
        %283 = vmatpush1.msra.mxu0 0.00390625
        %284 = vmatprep.subr.mxu0 0.0
        %285 = vmatpush1.msra.mxu0 0.00390625
        %286 = vmatprep.subr.mxu0 0.0
        %287 = vmatpush1.msra.mxu0 0.00390625
        %288 = vmatprep.subr.mxu0 0.0
        %289 = vmatpush1.msra.mxu0 0.00390625
        %290 = vmatprep.subr.mxu0 0.0
        %291 = vmatpush1.msra.mxu0 0.00390625
        %292 = vmatprep.subr.mxu0 0.0
        %293 = vmatpush1.msra.mxu0 0.00390625
        %294 = vmatprep.subr.mxu0 0.0
        %295 = vmatpush1.msra.mxu0 0.00390625
        %296 = vmatprep.subr.mxu0 0.0
        %297 = vmatpush1.msra.mxu0 0.00390625
        %298 = vmatprep.subr.mxu0 0.0
        %299 = vmatpush1.msra.mxu0 0.00390625
        %300 = vmatprep.subr.mxu0 0.0
        %301 = vmatpush1.msra.mxu0 0.00390625
        %302 = vmatprep.mubr.f32.mxu0 %v231
        %303 = vmatmul.mubr.f32.gmra.mrb[0].mxu0 %v230
        %v304 = vpop.f32.mrb[0].mxu0
        %v305 = vadd.f32 0.0, %v304
        %v306 = vpop.f32.mrb[0].mxu0
        %307 = vmatprep.mubr.f32.mxu0 %v233
        %308 = vmatmul.mubr.f32.gmra.mrb[0].mxu0 %v232
        %v309 = vpop.f32.mrb[0].mxu0
        %v310 = vadd.f32 0.0, %v309
        %v311 = vpop.f32.mrb[0].mxu0
        %312 = vmatprep.mubr.f32.mxu0 %v235
        %313 = vmatmul.mubr.f32.gmra.mrb[0].mxu0 %v234
        %v314 = vpop.f32.mrb[0].mxu0
        %v315 = vadd.f32 0.0, %v314
        %v316 = vpop.f32.mrb[0].mxu0
        %317 = vmatprep.mubr.f32.mxu0 %v237
        %318 = vmatmul.mubr.f32.gmra.mrb[0].mxu0 %v236
        %v319 = vpop.f32.mrb[0].mxu0
        %v320 = vadd.f32 0.0, %v319
        %v321 = vpop.f32.mrb[0].mxu0
        %322 = vdwg.mxu0
        %v323 = vmax.f32 %v230, %v231
        %324 = vmax.xlane.f32.xlu0 %v323
        %v325 = vpop.xlane.xlu0 %324
        %v326 = vmax.f32 %v232, %v233
        %327 = vmax.xlane.f32.xlu0 %v326
        %v328 = vpop.xlane.xlu0 %327
        %v329 = vmax.f32 %v234, %v235
        %330 = vmax.xlane.f32.xlu0 %v329
        %v331 = vpop.xlane.xlu0 %330
        %v332 = vmax.f32 %v236, %v237
        %333 = vmax.xlane.f32.xlu0 %v332
        %v334 = vpop.xlane.xlu0 %333
        %vm335 = vcmask 7168
        %v336 = vsel %vm335, %v305, %v325
        %v337 = vsel %vm335, %v310, %v328
        %v338 = vsel %vm335, %v315, %v331
        %v339 = vsel %vm335, %v320, %v334
        %v340 = vld [vmem:[%s2] sm:$0x3]
        %vm341 = vcmask 261120
        %v343 = vsel %vm341, %v340, 0
        %345 = vmatprep.subr.mxu0 0.0
        %346 = vmatpush1.msra.mxu0 %v336
        %347 = vmatprep.subr.mxu0 0.0
        %348 = vmatpush1.msra.mxu0 %v337
        %349 = vmatprep.subr.mxu0 0.0
        %350 = vmatpush1.msra.mxu0 %v338
        %351 = vmatprep.subr.mxu0 0.0
        %352 = vmatpush1.msra.mxu0 %v339
        %353 = vmatprep.subr.mxu0 0.0
        %354 = vmatpush1.msra.mxu0 0.0
        %355 = vmatprep.subr.mxu0 0.0
        %356 = vmatpush1.msra.mxu0 0.0
        %357 = vmatprep.subr.mxu0 0.0
        %358 = vmatpush1.msra.mxu0 0.0
        %359 = vmatprep.subr.mxu0 0.0
        %360 = vmatpush1.msra.mxu0 0.0
        %361 = vmatprep.subr.mxu0 0.0
        %362 = vmatpush1.msra.mxu0 0.0
        %363 = vmatprep.subr.mxu0 0.0
        %364 = vmatpush1.msra.mxu0 0.0
        %365 = vmatprep.subr.mxu0 0.0
        %366 = vmatpush1.msra.mxu0 0.0
        %367 = vmatprep.subr.mxu0 0.0
        %368 = vmatpush1.msra.mxu0 0.0
        %369 = vmatprep.subr.mxu0 0.0
        %370 = vmatpush1.msra.mxu0 0.0
        %371 = vmatprep.subr.mxu0 0.0
        %372 = vmatpush1.msra.mxu0 0.0
        %373 = vmatprep.subr.mxu0 0.0
        %374 = vmatpush1.msra.mxu0 0.0
        %375 = vmatprep.subr.mxu0 0.0
        %376 = vmatpush1.msra.mxu0 0.0
        %377 = vmatprep.subr.mxu0 0.0
        %378 = vmatpush1.msra.mxu0 0.0
        %379 = vmatprep.subr.mxu0 0.0
        %380 = vmatpush1.msra.mxu0 0.0
        %381 = vmatprep.subr.mxu0 0.0
        %382 = vmatpush1.msra.mxu0 0.0
        %383 = vmatprep.subr.mxu0 0.0
        %384 = vmatpush1.msra.mxu0 0.0
        %385 = vmatprep.subr.mxu0 0.0
        %386 = vmatpush1.msra.mxu0 0.0
        %387 = vmatprep.subr.mxu0 0.0
        %388 = vmatpush1.msra.mxu0 0.0
        %389 = vmatprep.subr.mxu0 0.0
        %390 = vmatpush1.msra.mxu0 0.0
        %391 = vmatprep.subr.mxu0 0.0
        %392 = vmatpush1.msra.mxu0 0.0
        %393 = vmatprep.subr.mxu0 0.0
        %394 = vmatpush1.msra.mxu0 0.0
        %395 = vmatprep.subr.mxu0 0.0
        %396 = vmatpush1.msra.mxu0 0.0
        %397 = vmatprep.subr.mxu0 0.0
        %398 = vmatpush1.msra.mxu0 0.0
        %399 = vmatprep.subr.mxu0 0.0
        %400 = vmatpush1.msra.mxu0 0.0
        %401 = vmatprep.subr.mxu0 0.0
        %402 = vmatpush1.msra.mxu0 0.0
        %403 = vmatprep.subr.mxu0 0.0
        %404 = vmatpush1.msra.mxu0 0.0
        %405 = vmatprep.subr.mxu0 0.0
        %406 = vmatpush1.msra.mxu0 0.0
        %407 = vmatprep.subr.mxu0 0.0
        %408 = vmatpush1.msra.mxu0 0.0
        %409 = vmatprep.mubr.f32.mxu0 0.0
        %410 = vmatmul.mubr.f32.gmra.mrb[0].mxu0 %v343
        %v411 = vpop.f32.mrb[0].mxu0
        %v412 = vadd.f32 0.0, %v411
        %v413 = vpop.f32.mrb[0].mxu0
        %414 = vdwg.mxu0
        %v415 = vmax.f32 %v412, 0.0
        %v416 = vld [vmem:[%s3] sm:$0xff]
        %v417 = vld [vmem:[%s3 + $0x8] sm:$0xff]
        %v418 = vld [vmem:[%s3 + $0x10] sm:$0xff]
        %v419 = vld [vmem:[%s3 + $0x18] sm:$0xff]
        %vm420 = vcmask 15360
        %v422 = vsel %vm420, %v416, 0
        %v425 = vsel %vm420, %v417, 0
        %v428 = vsel %vm420, %v418, 0
        %v431 = vsel %vm420, %v419, 0
        %vm433 = vcmask 1041408
        %v435 = vsel %vm433, %v415, 0
        %437 = vmatprep.subr.mxu0 0.0
        %438 = vmatpush1.msra.mxu0 %v435
        %439 = vmatprep.subr.mxu0 0.0
        %440 = vmatpush1.msra.mxu0 0.0
        %441 = vmatprep.subr.mxu0 0.0
        %442 = vmatpush1.msra.mxu0 0.0
        %443 = vmatprep.subr.mxu0 0.0
        %444 = vmatpush1.msra.mxu0 0.0
        %445 = vmatprep.subr.mxu0 0.0
        %446 = vmatpush1.msra.mxu0 0.0
        %447 = vmatprep.subr.mxu0 0.0
        %448 = vmatpush1.msra.mxu0 0.0
        %449 = vmatprep.subr.mxu0 0.0
        %450 = vmatpush1.msra.mxu0 0.0
        %451 = vmatprep.subr.mxu0 0.0
        %452 = vmatpush1.msra.mxu0 0.0
        %453 = vmatprep.subr.mxu0 0.0
        %454 = vmatpush1.msra.mxu0 0.0
        %455 = vmatprep.subr.mxu0 0.0
        %456 = vmatpush1.msra.mxu0 0.0
        %457 = vmatprep.subr.mxu0 0.0
        %458 = vmatpush1.msra.mxu0 0.0
        %459 = vmatprep.subr.mxu0 0.0
        %460 = vmatpush1.msra.mxu0 0.0
        %461 = vmatprep.subr.mxu0 0.0
        %462 = vmatpush1.msra.mxu0 0.0
        %463 = vmatprep.subr.mxu0 0.0
        %464 = vmatpush1.msra.mxu0 0.0
        %465 = vmatprep.subr.mxu0 0.0
        %466 = vmatpush1.msra.mxu0 0.0
        %467 = vmatprep.subr.mxu0 0.0
        %468 = vmatpush1.msra.mxu0 0.0
        %469 = vmatprep.subr.mxu0 0.0
        %470 = vmatpush1.msra.mxu0 0.0
        %471 = vmatprep.subr.mxu0 0.0
        %472 = vmatpush1.msra.mxu0 0.0
        %473 = vmatprep.subr.mxu0 0.0
        %474 = vmatpush1.msra.mxu0 0.0
        %475 = vmatprep.subr.mxu0 0.0
        %476 = vmatpush1.msra.mxu0 0.0
        %477 = vmatprep.subr.mxu0 0.0
        %478 = vmatpush1.msra.mxu0 0.0
        %479 = vmatprep.subr.mxu0 0.0
        %480 = vmatpush1.msra.mxu0 0.0
        %481 = vmatprep.subr.mxu0 0.0
        %482 = vmatpush1.msra.mxu0 0.0
        %483 = vmatprep.subr.mxu0 0.0
        %484 = vmatpush1.msra.mxu0 0.0
        %485 = vmatprep.subr.mxu0 0.0
        %486 = vmatpush1.msra.mxu0 0.0
        %487 = vmatprep.subr.mxu0 0.0
        %488 = vmatpush1.msra.mxu0 0.0
        %489 = vmatprep.subr.mxu0 0.0
        %490 = vmatpush1.msra.mxu0 0.0
        %491 = vmatprep.subr.mxu0 0.0
        %492 = vmatpush1.msra.mxu0 0.0
        %493 = vmatprep.subr.mxu0 0.0
        %494 = vmatpush1.msra.mxu0 0.0
        %495 = vmatprep.subr.mxu0 0.0
        %496 = vmatpush1.msra.mxu0 0.0
        %497 = vmatprep.subr.mxu0 0.0
        %498 = vmatpush1.msra.mxu0 0.0
        %499 = vmatprep.subr.mxu0 0.0
        %500 = vmatpush1.msra.mxu0 0.0
        %501 = vmatprep.mubr.f32.mxu0 0.0
        %502 = vmatmul.mubr.f32.gmra.mrb[0].mxu0 %v422
        %v503 = vpop.f32.mrb[0].mxu0
        %v504 = vadd.f32 0.0, %v503
        %v505 = vpop.f32.mrb[0].mxu0
        %506 = vmatprep.mubr.f32.mxu0 0.0
        %507 = vmatmul.mubr.f32.gmra.mrb[0].mxu0 %v425
        %v508 = vpop.f32.mrb[0].mxu0
        %v509 = vadd.f32 0.0, %v508
        %v510 = vpop.f32.mrb[0].mxu0
        %511 = vmatprep.mubr.f32.mxu0 0.0
        %512 = vmatmul.mubr.f32.gmra.mrb[0].mxu0 %v428
        %v513 = vpop.f32.mrb[0].mxu0
        %v514 = vadd.f32 0.0, %v513
        %v515 = vpop.f32.mrb[0].mxu0
        %516 = vmatprep.mubr.f32.mxu0 0.0
        %517 = vmatmul.mubr.f32.gmra.mrb[0].mxu0 %v431
        %v518 = vpop.f32.mrb[0].mxu0
        %v519 = vadd.f32 0.0, %v518
        %v520 = vpop.f32.mrb[0].mxu0
        %521 = vdwg.mxu0
        %v522 = vsel %vm420, %v504, 0.0
        %523 = vadd.xlane.f32.xlu0 %v522
        %v524 = vpop.xlane.xlu0 %523
        %v525 = vsel %vm420, %v509, 0.0
        %526 = vadd.xlane.f32.xlu0 %v525
        %v527 = vpop.xlane.xlu0 %526
        %v528 = vsel %vm420, %v514, 0.0
        %529 = vadd.xlane.f32.xlu0 %v528
        %v530 = vpop.xlane.xlu0 %529
        %v531 = vsel %vm420, %v519, 0.0
        %532 = vadd.xlane.f32.xlu0 %v531
        %v533 = vpop.xlane.xlu0 %532
        %v534 = vmul.f32 %v524, 0.5
        %v535 = vmul.f32 %v527, 0.5
        %v536 = vmul.f32 %v530, 0.5
        %v537 = vmul.f32 %v533, 0.5
        %v538 = vtanh.pop %v534
        %v539 = vtanh.pop %v535
        %v540 = vtanh.pop %v536
        %v541 = vtanh.pop %v537
        %v542 = vadd.f32 %v538, 1.0
        %v543 = vadd.f32 %v539, 1.0
        %v544 = vadd.f32 %v540, 1.0
        %v545 = vadd.f32 %v541, 1.0
        %v546 = vmul.f32 %v542, 0.5
        %v547 = vmul.f32 %v543, 0.5
        %v548 = vmul.f32 %v544, 0.5
        %v549 = vmul.f32 %v545, 0.5
        %v550 = vmul.f32 %v230, %v546
        %v551 = vmul.f32 %v231, %v546
        %v552 = vmul.f32 %v232, %v547
        %v553 = vmul.f32 %v233, %v547
        %v554 = vmul.f32 %v234, %v548
        %v555 = vmul.f32 %v235, %v548
        %v556 = vmul.f32 %v236, %v549
        %v557 = vmul.f32 %v237, %v549
        %558 = vst [vmem:[%s229] sm:$0xff] %v550
        %559 = vst [vmem:[%s229 + $0x8] sm:$0xff] %v551
        %560 = vst [vmem:[%s229 + $0x10] sm:$0xff] %v552
        %561 = vst [vmem:[%s229 + $0x18] sm:$0xff] %v553
        %562 = vst [vmem:[%s229 + $0x20] sm:$0xff] %v554
        %563 = vst [vmem:[%s229 + $0x28] sm:$0xff] %v555
        %564 = vst [vmem:[%s229 + $0x30] sm:$0xff] %v556
        %565 = vst [vmem:[%s229 + $0x38] sm:$0xff] %v557
        %v566 = vld [vmem:[%s229] sm:$0xff]
        %v567 = vld [vmem:[%s229 + $0x8] sm:$0xff]
        %v568 = vld [vmem:[%s229 + $0x10] sm:$0xff]
        %v569 = vld [vmem:[%s229 + $0x18] sm:$0xff]
        %v570 = vld [vmem:[%s229 + $0x20] sm:$0xff]
        %v571 = vld [vmem:[%s229 + $0x28] sm:$0xff]
        %v572 = vld [vmem:[%s229 + $0x30] sm:$0xff]
        %v573 = vld [vmem:[%s229 + $0x38] sm:$0xff]
        %v575 = vsel %vm341, 0.03125, 0
        %577 = vmatprep.subr.mxu0 %v567
        %578 = vmatpush1.msra.mxu0 %v566
        %579 = vmatprep.subr.mxu0 %v569
        %580 = vmatpush1.msra.mxu0 %v568
        %581 = vmatprep.subr.mxu0 %v571
        %582 = vmatpush1.msra.mxu0 %v570
        %583 = vmatprep.subr.mxu0 %v573
        %584 = vmatpush1.msra.mxu0 %v572
        %585 = vmatprep.subr.mxu0 0.0
        %586 = vmatpush1.msra.mxu0 0.0
        %587 = vmatprep.subr.mxu0 0.0
        %588 = vmatpush1.msra.mxu0 0.0
        %589 = vmatprep.subr.mxu0 0.0
        %590 = vmatpush1.msra.mxu0 0.0
        %591 = vmatprep.subr.mxu0 0.0
        %592 = vmatpush1.msra.mxu0 0.0
        %593 = vmatprep.subr.mxu0 0.0
        %594 = vmatpush1.msra.mxu0 0.0
        %595 = vmatprep.subr.mxu0 0.0
        %596 = vmatpush1.msra.mxu0 0.0
        %597 = vmatprep.subr.mxu0 0.0
        %598 = vmatpush1.msra.mxu0 0.0
        %599 = vmatprep.subr.mxu0 0.0
        %600 = vmatpush1.msra.mxu0 0.0
        %601 = vmatprep.subr.mxu0 0.0
        %602 = vmatpush1.msra.mxu0 0.0
        %603 = vmatprep.subr.mxu0 0.0
        %604 = vmatpush1.msra.mxu0 0.0
        %605 = vmatprep.subr.mxu0 0.0
        %606 = vmatpush1.msra.mxu0 0.0
        %607 = vmatprep.subr.mxu0 0.0
        %608 = vmatpush1.msra.mxu0 0.0
        %609 = vmatprep.subr.mxu0 0.0
        %610 = vmatpush1.msra.mxu0 0.0
        %611 = vmatprep.subr.mxu0 0.0
        %612 = vmatpush1.msra.mxu0 0.0
        %613 = vmatprep.subr.mxu0 0.0
        %614 = vmatpush1.msra.mxu0 0.0
        %615 = vmatprep.subr.mxu0 0.0
        %616 = vmatpush1.msra.mxu0 0.0
        %617 = vmatprep.subr.mxu0 0.0
        %618 = vmatpush1.msra.mxu0 0.0
        %619 = vmatprep.subr.mxu0 0.0
        %620 = vmatpush1.msra.mxu0 0.0
        %621 = vmatprep.subr.mxu0 0.0
        %622 = vmatpush1.msra.mxu0 0.0
        %623 = vmatprep.subr.mxu0 0.0
        %624 = vmatpush1.msra.mxu0 0.0
        %625 = vmatprep.subr.mxu0 0.0
        %626 = vmatpush1.msra.mxu0 0.0
        %627 = vmatprep.subr.mxu0 0.0
        %628 = vmatpush1.msra.mxu0 0.0
        %629 = vmatprep.subr.mxu0 0.0
        %630 = vmatpush1.msra.mxu0 0.0
        %631 = vmatprep.subr.mxu0 0.0
        %632 = vmatpush1.msra.mxu0 0.0
        %633 = vmatprep.subr.mxu0 0.0
        %634 = vmatpush1.msra.mxu0 0.0
        %635 = vmatprep.subr.mxu0 0.0
        %636 = vmatpush1.msra.mxu0 0.0
        %637 = vmatprep.subr.mxu0 0.0
        %638 = vmatpush1.msra.mxu0 0.0
        %639 = vmatprep.subr.mxu0 0.0
        %640 = vmatpush1.msra.mxu0 0.0
        %641 = vmatprep.mubr.f32.mxu0 0.0
        %642 = vmatmul.mubr.f32.gmra.mrb[0].mxu0 %v575
        %v643 = vpop.f32.mrb[0].mxu0
        %v644 = vadd.f32 0.0, %v643
        %v645 = vpop.f32.mrb[0].mxu0
        %v646 = vadd.f32 0.0, %v645
        %647 = vdwg.mxu0
        %v648 = vmax.f32 %v566, %v570
        %v649 = vmax.f32 %v568, %v572
        %v650 = vmax.f32 %v648, %v649
        %v651 = vrot.slane %v650, 4
        %v652 = vmax.f32 %v650, %v651
        %v653 = vrot.slane %v652, 2
        %v654 = vmax.f32 %v652, %v653
        %v655 = vrot.slane %v654, 1
        %v656 = vmax.f32 %v654, %v655
        %v657 = vmax.f32 %v567, %v571
        %v658 = vmax.f32 %v569, %v573
        %v659 = vmax.f32 %v657, %v658
        %v660 = vrot.slane %v659, 4
        %v661 = vmax.f32 %v659, %v660
        %v662 = vrot.slane %v661, 2
        %v663 = vmax.f32 %v661, %v662
        %v664 = vrot.slane %v663, 1
        %v665 = vmax.f32 %v663, %v664
        %vm666 = vcmask 1040384
        %v667 = vsel %vm666, %v644, %v656
        %v668 = vsel %vm666, %v646, %v665
        %671 = vrot.lane.b32.xlu0 %v667, 51
        %v672 = vpop.permute.xlu0 %671
        %673 = vrot.lane.b32.xlu0 %v668, 51
        %v674 = vpop.permute.xlu0 %673
        %vm675 = vcmask 416768
        %v676 = vsel %vm675, %v672, %v674
        %v680 = vsel %vm675, 0.0, %v672
        %v681 = vsel %vm675, %v674, 0.0
        %v682 = vlaneseq
        %v683 = vand.u32 %v682, 127
        %v684 = vadd.s32 %v683, 128
        %vm685 = vcmp.lt.s32.totalorder %v683, 0
        %v686 = vsub.s32 0, %v683
        %v687 = vsel %vm685, %v686, %v683
        %v688 = vshrl.u32 %v687, 4
        %v689 = vand.u32 %v687, 15
        %v690 = vsub.s32 0, %v689
        %v691 = vsel %vm685, %v690, %v689
        %vm692 = vcmp.lt.s32.totalorder %v684, 0
        %v693 = vsub.s32 0, %v684
        %v694 = vsel %vm692, %v693, %v684
        %v695 = vshrl.u32 %v694, 4
        %v696 = vand.u32 %v694, 15
        %v697 = vsub.s32 0, %v696
        %v698 = vsel %vm692, %v697, %v696
        %vm699 = vcmp.ne.s32.totalorder %v691, 0
        %vm700 = vcmp.ne.s32.totalorder %v698, 0
        %vm701 = vcmp.lt.s32.totalorder %v691, 0
        %vm702 = vcmp.lt.s32.totalorder %v698, 0
        %vm703 = vmand %vm701, %vm699
        %vm704 = vmand %vm702, %vm700
        %v705 = vadd.s32 %v691, 16
        %v706 = vadd.s32 %v698, 16
        %v707 = vsel %vm703, %v705, %v691
        %v708 = vsel %vm704, %v706, %v698
        %v709 = vlaneseq
        %v710 = vshrl.u32 %v709, 7
        %vm711 = vcmp.eq.s32.totalorder %v710, 0
        %s712 = sld [smem:[#allocation2]]
        %s713 = sld [smem:[#allocation2 + $0x31]]
        %v714 = vstv %s712
        %v715 = vstv %s713
        %v716 = vsel %vm711, %v714, %v715
        %v717 = vmul.f32 %v716, %v680
        %v718 = vmul.f32 %v716, %v676
        %v719 = vadd.f32 %v717, 0.0
        %v720 = vadd.f32 %v718, 0.0
        %s721 = sld [smem:[#allocation2 + $0x7]]
        %s722 = sld [smem:[#allocation2 + $0x38]]
        %v723 = vstv %s721
        %v724 = vstv %s722
        %v725 = vsel %vm711, %v723, %v724
        %v726 = vmul.f32 %v725, %v680
        %v727 = vmul.f32 %v725, %v676
        %v728 = vmul.f32 %v725, %v681
        %732 = vrot.lane.b32.xlu0 %v726, 112
        %v733 = vpop.permute.xlu0 %732
        %734 = vrot.lane.b32.xlu0 %v727, 112
        %v735 = vpop.permute.xlu0 %734
        %736 = vrot.lane.b32.xlu0 %v728, 112
        %v737 = vpop.permute.xlu0 %736
        %vm738 = vcmask 916480
        %v739 = vsel %vm738, %v733, %v735
        %v740 = vsel %vm738, %v735, %v737
        %v743 = vadd.f32 %v719, %v739
        %v744 = vadd.f32 %v720, %v740
        %s745 = sld [smem:[#allocation2 + $0xe]]
        %s746 = sld [smem:[#allocation2 + $0x3f]]
        %v747 = vstv %s745
        %v748 = vstv %s746
        %v749 = vsel %vm711, %v747, %v748
        %v750 = vmul.f32 %v749, %v680
        %v751 = vmul.f32 %v749, %v676
        %v752 = vmul.f32 %v749, %v681
        %756 = vrot.lane.b32.xlu0 %v750, 96
        %v757 = vpop.permute.xlu0 %756
        %758 = vrot.lane.b32.xlu0 %v751, 96
        %v759 = vpop.permute.xlu0 %758
        %760 = vrot.lane.b32.xlu0 %v752, 96
        %v761 = vpop.permute.xlu0 %760
        %vm762 = vcmask 785408
        %v763 = vsel %vm762, %v757, %v759
        %v764 = vsel %vm762, %v759, %v761
        %v767 = vadd.f32 %v743, %v763
        %v768 = vadd.f32 %v744, %v764
        %s769 = sld [smem:[#allocation2 + $0x15]]
        %s770 = sld [smem:[#allocation2 + $0x46]]
        %v771 = vstv %s769
        %v772 = vstv %s770
        %v773 = vsel %vm711, %v771, %v772
        %v774 = vmul.f32 %v773, %v680
        %v775 = vmul.f32 %v773, %v676
        %v776 = vmul.f32 %v773, %v681
        %780 = vrot.lane.b32.xlu0 %v774, 80
        %v781 = vpop.permute.xlu0 %780
        %782 = vrot.lane.b32.xlu0 %v775, 80
        %v783 = vpop.permute.xlu0 %782
        %784 = vrot.lane.b32.xlu0 %v776, 80
        %v785 = vpop.permute.xlu0 %784
        %vm786 = vcmask 654336
        %v787 = vsel %vm786, %v781, %v783
        %v788 = vsel %vm786, %v783, %v785
        %v791 = vadd.f32 %v767, %v787
        %v792 = vadd.f32 %v768, %v788
        %s793 = sld [smem:[#allocation2 + $0x1c]]
        %s794 = sld [smem:[#allocation2 + $0x4d]]
        %v795 = vstv %s793
        %v796 = vstv %s794
        %v797 = vsel %vm711, %v795, %v796
        %v798 = vmul.f32 %v797, %v680
        %v799 = vmul.f32 %v797, %v676
        %v800 = vmul.f32 %v797, %v681
        %804 = vrot.lane.b32.xlu0 %v798, 64
        %v805 = vpop.permute.xlu0 %804
        %806 = vrot.lane.b32.xlu0 %v799, 64
        %v807 = vpop.permute.xlu0 %806
        %808 = vrot.lane.b32.xlu0 %v800, 64
        %v809 = vpop.permute.xlu0 %808
        %vm810 = vcmask 523264
        %v811 = vsel %vm810, %v805, %v807
        %v812 = vsel %vm810, %v807, %v809
        %v815 = vadd.f32 %v791, %v811
        %v816 = vadd.f32 %v792, %v812
        %s817 = sld [smem:[#allocation2 + $0x23]]
        %s818 = sld [smem:[#allocation2 + $0x54]]
        %v819 = vstv %s817
        %v820 = vstv %s818
        %v821 = vsel %vm711, %v819, %v820
        %v822 = vmul.f32 %v821, %v680
        %v823 = vmul.f32 %v821, %v676
        %v824 = vmul.f32 %v821, %v681
        %828 = vrot.lane.b32.xlu0 %v822, 48
        %v829 = vpop.permute.xlu0 %828
        %830 = vrot.lane.b32.xlu0 %v823, 48
        %v831 = vpop.permute.xlu0 %830
        %832 = vrot.lane.b32.xlu0 %v824, 48
        %v833 = vpop.permute.xlu0 %832
        %vm834 = vcmask 392192
        %v835 = vsel %vm834, %v829, %v831
        %v836 = vsel %vm834, %v831, %v833
        %v839 = vadd.f32 %v815, %v835
        %v840 = vadd.f32 %v816, %v836
        %s841 = sld [smem:[#allocation2 + $0x2a]]
        %s842 = sld [smem:[#allocation2 + $0x5b]]
        %v843 = vstv %s841
        %v844 = vstv %s842
        %v845 = vsel %vm711, %v843, %v844
        %v846 = vmul.f32 %v845, %v680
        %v847 = vmul.f32 %v845, %v676
        %v848 = vmul.f32 %v845, %v681
        %852 = vrot.lane.b32.xlu0 %v846, 32
        %v853 = vpop.permute.xlu0 %852
        %854 = vrot.lane.b32.xlu0 %v847, 32
        %v855 = vpop.permute.xlu0 %854
        %856 = vrot.lane.b32.xlu0 %v848, 32
        %v857 = vpop.permute.xlu0 %856
        %v858 = vsel %vm341, %v853, %v855
        %v859 = vsel %vm341, %v855, %v857
        %v862 = vadd.f32 %v839, %v858
        %v863 = vadd.f32 %v840, %v859
        %v864 = vadd.s32 %v707, 4294967293
        %v865 = vadd.s32 %v708, 4294967293
        %vm866 = vcmp.ge.s32.totalorder %v864, 0
        %vm867 = vcmp.ge.s32.totalorder %v865, 0
        %vm868 = vcmp.lt.s32.totalorder %v864, 16
        %vm869 = vcmp.lt.s32.totalorder %v865, 16
        %vm870 = vmand %vm866, %vm868
        %vm871 = vmand %vm867, %vm869
        %v872 = vsel %vm870, %v862, 0.0
        %v873 = vsel %vm871, %v863, 0.0
        %v874 = vadd.f32 %v872, 0.0
        %v875 = vadd.f32 %v873, 0.0
        %s876 = sld [smem:[#allocation2 + $0x1]]
        %s877 = sld [smem:[#allocation2 + $0x32]]
        %v878 = vstv %s876
        %v879 = vstv %s877
        %v880 = vsel %vm711, %v878, %v879
        %v881 = vmul.f32 %v880, %v680
        %v882 = vmul.f32 %v880, %v676
        %v883 = vmul.f32 %v880, %v681
        %v884 = vadd.f32 %v881, 0.0
        %v885 = vadd.f32 %v882, 0.0
        %v886 = vadd.f32 %v883, 0.0
        %s887 = sld [smem:[#allocation2 + $0x8]]
        %s888 = sld [smem:[#allocation2 + $0x39]]
        %v889 = vstv %s887
        %v890 = vstv %s888
        %v891 = vsel %vm711, %v889, %v890
        %v892 = vmul.f32 %v891, %v680
        %v893 = vmul.f32 %v891, %v676
        %v894 = vmul.f32 %v891, %v681
        %898 = vrot.lane.b32.xlu0 %v892, 112
        %v899 = vpop.permute.xlu0 %898
        %900 = vrot.lane.b32.xlu0 %v893, 112
        %v901 = vpop.permute.xlu0 %900
        %902 = vrot.lane.b32.xlu0 %v894, 112
        %v903 = vpop.permute.xlu0 %902
        %v904 = vsel %vm738, %v899, %v901
        %v905 = vsel %vm738, %v901, %v903
        %v909 = vadd.f32 %v884, %v904
        %v910 = vadd.f32 %v885, %v905
        %v911 = vadd.f32 %v886, %v903
        %s912 = sld [smem:[#allocation2 + $0xf]]
        %s913 = sld [smem:[#allocation2 + $0x40]]
        %v914 = vstv %s912
        %v915 = vstv %s913
        %v916 = vsel %vm711, %v914, %v915
        %v917 = vmul.f32 %v916, %v680
        %v918 = vmul.f32 %v916, %v676
        %v919 = vmul.f32 %v916, %v681
        %923 = vrot.lane.b32.xlu0 %v917, 96
        %v924 = vpop.permute.xlu0 %923
        %925 = vrot.lane.b32.xlu0 %v918, 96
        %v926 = vpop.permute.xlu0 %925
        %927 = vrot.lane.b32.xlu0 %v919, 96
        %v928 = vpop.permute.xlu0 %927
        %v929 = vsel %vm762, %v924, %v926
        %v930 = vsel %vm762, %v926, %v928
        %v934 = vadd.f32 %v909, %v929
        %v935 = vadd.f32 %v910, %v930
        %v936 = vadd.f32 %v911, %v928
        %s937 = sld [smem:[#allocation2 + $0x16]]
        %s938 = sld [smem:[#allocation2 + $0x47]]
        %v939 = vstv %s937
        %v940 = vstv %s938
        %v941 = vsel %vm711, %v939, %v940
        %v942 = vmul.f32 %v941, %v680
        %v943 = vmul.f32 %v941, %v676
        %v944 = vmul.f32 %v941, %v681
        %948 = vrot.lane.b32.xlu0 %v942, 80
        %v949 = vpop.permute.xlu0 %948
        %950 = vrot.lane.b32.xlu0 %v943, 80
        %v951 = vpop.permute.xlu0 %950
        %952 = vrot.lane.b32.xlu0 %v944, 80
        %v953 = vpop.permute.xlu0 %952
        %v954 = vsel %vm786, %v949, %v951
        %v955 = vsel %vm786, %v951, %v953
        %v959 = vadd.f32 %v934, %v954
        %v960 = vadd.f32 %v935, %v955
        %v961 = vadd.f32 %v936, %v953
        %s962 = sld [smem:[#allocation2 + $0x1d]]
        %s963 = sld [smem:[#allocation2 + $0x4e]]
        %v964 = vstv %s962
        %v965 = vstv %s963
        %v966 = vsel %vm711, %v964, %v965
        %v967 = vmul.f32 %v966, %v680
        %v968 = vmul.f32 %v966, %v676
        %v969 = vmul.f32 %v966, %v681
        %973 = vrot.lane.b32.xlu0 %v967, 64
        %v974 = vpop.permute.xlu0 %973
        %975 = vrot.lane.b32.xlu0 %v968, 64
        %v976 = vpop.permute.xlu0 %975
        %977 = vrot.lane.b32.xlu0 %v969, 64
        %v978 = vpop.permute.xlu0 %977
        %v979 = vsel %vm810, %v974, %v976
        %v980 = vsel %vm810, %v976, %v978
        %v984 = vadd.f32 %v959, %v979
        %v985 = vadd.f32 %v960, %v980
        %v986 = vadd.f32 %v961, %v978
        %s987 = sld [smem:[#allocation2 + $0x24]]
        %s988 = sld [smem:[#allocation2 + $0x55]]
        %v989 = vstv %s987
        %v990 = vstv %s988
        %v991 = vsel %vm711, %v989, %v990
        %v992 = vmul.f32 %v991, %v680
        %v993 = vmul.f32 %v991, %v676
        %v994 = vmul.f32 %v991, %v681
        %998 = vrot.lane.b32.xlu0 %v992, 48
        %v999 = vpop.permute.xlu0 %998
        %1000 = vrot.lane.b32.xlu0 %v993, 48
        %v1001 = vpop.permute.xlu0 %1000
        %1002 = vrot.lane.b32.xlu0 %v994, 48
        %v1003 = vpop.permute.xlu0 %1002
        %v1004 = vsel %vm834, %v999, %v1001
        %v1005 = vsel %vm834, %v1001, %v1003
        %v1009 = vadd.f32 %v984, %v1004
        %v1010 = vadd.f32 %v985, %v1005
        %v1011 = vadd.f32 %v986, %v1003
        %s1012 = sld [smem:[#allocation2 + $0x2b]]
        %s1013 = sld [smem:[#allocation2 + $0x5c]]
        %v1014 = vstv %s1012
        %v1015 = vstv %s1013
        %v1016 = vsel %vm711, %v1014, %v1015
        %v1017 = vmul.f32 %v1016, %v680
        %v1018 = vmul.f32 %v1016, %v676
        %v1019 = vmul.f32 %v1016, %v681
        %1023 = vrot.lane.b32.xlu0 %v1017, 32
        %v1024 = vpop.permute.xlu0 %1023
        %1025 = vrot.lane.b32.xlu0 %v1018, 32
        %v1026 = vpop.permute.xlu0 %1025
        %1027 = vrot.lane.b32.xlu0 %v1019, 32
        %v1028 = vpop.permute.xlu0 %1027
        %v1029 = vsel %vm341, %v1024, %v1026
        %v1030 = vsel %vm341, %v1026, %v1028
        %v1034 = vadd.f32 %v1009, %v1029
        %v1035 = vadd.f32 %v1010, %v1030
        %v1036 = vadd.f32 %v1011, %v1028
        %v1037 = vadd.s32 %v707, 4294967294
        %v1038 = vadd.s32 %v708, 4294967294
        %vm1039 = vcmp.ge.s32.totalorder %v1037, 0
        %vm1040 = vcmp.ge.s32.totalorder %v1038, 0
        %vm1041 = vcmp.lt.s32.totalorder %v1037, 16
        %vm1042 = vcmp.lt.s32.totalorder %v1038, 16
        %vm1043 = vmand %vm1039, %vm1041
        %vm1044 = vmand %vm1040, %vm1042
        %1048 = vrot.lane.b32.xlu0 %v1034, 127
        %v1049 = vpop.permute.xlu0 %1048
        %1050 = vrot.lane.b32.xlu0 %v1035, 127
        %v1051 = vpop.permute.xlu0 %1050
        %1052 = vrot.lane.b32.xlu0 %v1036, 127
        %v1053 = vpop.permute.xlu0 %1052
        %vm1054 = vcmask 1039360
        %v1055 = vsel %vm1054, %v1049, %v1051
        %v1056 = vsel %vm1054, %v1051, %v1053
        %v1059 = vsel %vm1043, %v1055, 0.0
        %v1060 = vsel %vm1044, %v1056, 0.0
        %v1061 = vadd.f32 %v874, %v1059
        %v1062 = vadd.f32 %v875, %v1060
        %s1063 = sld [smem:[#allocation2 + $0x2]]
        %s1064 = sld [smem:[#allocation2 + $0x33]]
        %v1065 = vstv %s1063
        %v1066 = vstv %s1064
        %v1067 = vsel %vm711, %v1065, %v1066
        %v1068 = vmul.f32 %v1067, %v680
        %v1069 = vmul.f32 %v1067, %v676
        %v1070 = vmul.f32 %v1067, %v681
        %v1071 = vadd.f32 %v1068, 0.0
        %v1072 = vadd.f32 %v1069, 0.0
        %v1073 = vadd.f32 %v1070, 0.0
        %s1074 = sld [smem:[#allocation2 + $0x9]]
        %s1075 = sld [smem:[#allocation2 + $0x3a]]
        %v1076 = vstv %s1074
        %v1077 = vstv %s1075
        %v1078 = vsel %vm711, %v1076, %v1077
        %v1079 = vmul.f32 %v1078, %v680
        %v1080 = vmul.f32 %v1078, %v676
        %v1081 = vmul.f32 %v1078, %v681
        %1085 = vrot.lane.b32.xlu0 %v1079, 112
        %v1086 = vpop.permute.xlu0 %1085
        %1087 = vrot.lane.b32.xlu0 %v1080, 112
        %v1088 = vpop.permute.xlu0 %1087
        %1089 = vrot.lane.b32.xlu0 %v1081, 112
        %v1090 = vpop.permute.xlu0 %1089
        %v1091 = vsel %vm738, %v1086, %v1088
        %v1092 = vsel %vm738, %v1088, %v1090
        %v1096 = vadd.f32 %v1071, %v1091
        %v1097 = vadd.f32 %v1072, %v1092
        %v1098 = vadd.f32 %v1073, %v1090
        %s1099 = sld [smem:[#allocation2 + $0x10]]
        %s1100 = sld [smem:[#allocation2 + $0x41]]
        %v1101 = vstv %s1099
        %v1102 = vstv %s1100
        %v1103 = vsel %vm711, %v1101, %v1102
        %v1104 = vmul.f32 %v1103, %v680
        %v1105 = vmul.f32 %v1103, %v676
        %v1106 = vmul.f32 %v1103, %v681
        %1110 = vrot.lane.b32.xlu0 %v1104, 96
        %v1111 = vpop.permute.xlu0 %1110
        %1112 = vrot.lane.b32.xlu0 %v1105, 96
        %v1113 = vpop.permute.xlu0 %1112
        %1114 = vrot.lane.b32.xlu0 %v1106, 96
        %v1115 = vpop.permute.xlu0 %1114
        %v1116 = vsel %vm762, %v1111, %v1113
        %v1117 = vsel %vm762, %v1113, %v1115
        %v1121 = vadd.f32 %v1096, %v1116
        %v1122 = vadd.f32 %v1097, %v1117
        %v1123 = vadd.f32 %v1098, %v1115
        %s1124 = sld [smem:[#allocation2 + $0x17]]
        %s1125 = sld [smem:[#allocation2 + $0x48]]
        %v1126 = vstv %s1124
        %v1127 = vstv %s1125
        %v1128 = vsel %vm711, %v1126, %v1127
        %v1129 = vmul.f32 %v1128, %v680
        %v1130 = vmul.f32 %v1128, %v676
        %v1131 = vmul.f32 %v1128, %v681
        %1135 = vrot.lane.b32.xlu0 %v1129, 80
        %v1136 = vpop.permute.xlu0 %1135
        %1137 = vrot.lane.b32.xlu0 %v1130, 80
        %v1138 = vpop.permute.xlu0 %1137
        %1139 = vrot.lane.b32.xlu0 %v1131, 80
        %v1140 = vpop.permute.xlu0 %1139
        %v1141 = vsel %vm786, %v1136, %v1138
        %v1142 = vsel %vm786, %v1138, %v1140
        %v1146 = vadd.f32 %v1121, %v1141
        %v1147 = vadd.f32 %v1122, %v1142
        %v1148 = vadd.f32 %v1123, %v1140
        %s1149 = sld [smem:[#allocation2 + $0x1e]]
        %s1150 = sld [smem:[#allocation2 + $0x4f]]
        %v1151 = vstv %s1149
        %v1152 = vstv %s1150
        %v1153 = vsel %vm711, %v1151, %v1152
        %v1154 = vmul.f32 %v1153, %v680
        %v1155 = vmul.f32 %v1153, %v676
        %v1156 = vmul.f32 %v1153, %v681
        %1160 = vrot.lane.b32.xlu0 %v1154, 64
        %v1161 = vpop.permute.xlu0 %1160
        %1162 = vrot.lane.b32.xlu0 %v1155, 64
        %v1163 = vpop.permute.xlu0 %1162
        %1164 = vrot.lane.b32.xlu0 %v1156, 64
        %v1165 = vpop.permute.xlu0 %1164
        %v1166 = vsel %vm810, %v1161, %v1163
        %v1167 = vsel %vm810, %v1163, %v1165
        %v1171 = vadd.f32 %v1146, %v1166
        %v1172 = vadd.f32 %v1147, %v1167
        %v1173 = vadd.f32 %v1148, %v1165
        %s1174 = sld [smem:[#allocation2 + $0x25]]
        %s1175 = sld [smem:[#allocation2 + $0x56]]
        %v1176 = vstv %s1174
        %v1177 = vstv %s1175
        %v1178 = vsel %vm711, %v1176, %v1177
        %v1179 = vmul.f32 %v1178, %v680
        %v1180 = vmul.f32 %v1178, %v676
        %v1181 = vmul.f32 %v1178, %v681
        %1185 = vrot.lane.b32.xlu0 %v1179, 48
        %v1186 = vpop.permute.xlu0 %1185
        %1187 = vrot.lane.b32.xlu0 %v1180, 48
        %v1188 = vpop.permute.xlu0 %1187
        %1189 = vrot.lane.b32.xlu0 %v1181, 48
        %v1190 = vpop.permute.xlu0 %1189
        %v1191 = vsel %vm834, %v1186, %v1188
        %v1192 = vsel %vm834, %v1188, %v1190
        %v1196 = vadd.f32 %v1171, %v1191
        %v1197 = vadd.f32 %v1172, %v1192
        %v1198 = vadd.f32 %v1173, %v1190
        %s1199 = sld [smem:[#allocation2 + $0x2c]]
        %s1200 = sld [smem:[#allocation2 + $0x5d]]
        %v1201 = vstv %s1199
        %v1202 = vstv %s1200
        %v1203 = vsel %vm711, %v1201, %v1202
        %v1204 = vmul.f32 %v1203, %v680
        %v1205 = vmul.f32 %v1203, %v676
        %v1206 = vmul.f32 %v1203, %v681
        %1210 = vrot.lane.b32.xlu0 %v1204, 32
        %v1211 = vpop.permute.xlu0 %1210
        %1212 = vrot.lane.b32.xlu0 %v1205, 32
        %v1213 = vpop.permute.xlu0 %1212
        %1214 = vrot.lane.b32.xlu0 %v1206, 32
        %v1215 = vpop.permute.xlu0 %1214
        %v1216 = vsel %vm341, %v1211, %v1213
        %v1217 = vsel %vm341, %v1213, %v1215
        %v1221 = vadd.f32 %v1196, %v1216
        %v1222 = vadd.f32 %v1197, %v1217
        %v1223 = vadd.f32 %v1198, %v1215
        %v1224 = vadd.s32 %v707, 4294967295
        %v1225 = vadd.s32 %v708, 4294967295
        %vm1226 = vcmp.ge.s32.totalorder %v1224, 0
        %vm1227 = vcmp.ge.s32.totalorder %v1225, 0
        %vm1228 = vcmp.lt.s32.totalorder %v1224, 16
        %vm1229 = vcmp.lt.s32.totalorder %v1225, 16
        %vm1230 = vmand %vm1226, %vm1228
        %vm1231 = vmand %vm1227, %vm1229
        %1235 = vrot.lane.b32.xlu0 %v1221, 126
        %v1236 = vpop.permute.xlu0 %1235
        %1237 = vrot.lane.b32.xlu0 %v1222, 126
        %v1238 = vpop.permute.xlu0 %1237
        %1239 = vrot.lane.b32.xlu0 %v1223, 126
        %v1240 = vpop.permute.xlu0 %1239
        %vm1241 = vcmask 1031168
        %v1242 = vsel %vm1241, %v1236, %v1238
        %v1243 = vsel %vm1241, %v1238, %v1240
        %v1246 = vsel %vm1230, %v1242, 0.0
        %v1247 = vsel %vm1231, %v1243, 0.0
        %v1248 = vadd.f32 %v1061, %v1246
        %v1249 = vadd.f32 %v1062, %v1247
        %s1250 = sld [smem:[#allocation2 + $0x3]]
        %s1251 = sld [smem:[#allocation2 + $0x34]]
        %v1252 = vstv %s1250
        %v1253 = vstv %s1251
        %v1254 = vsel %vm711, %v1252, %v1253
        %v1255 = vmul.f32 %v1254, %v680
        %v1256 = vmul.f32 %v1254, %v676
        %v1257 = vmul.f32 %v1254, %v681
        %v1258 = vadd.f32 %v1255, 0.0
        %v1259 = vadd.f32 %v1256, 0.0
        %v1260 = vadd.f32 %v1257, 0.0
        %s1261 = sld [smem:[#allocation2 + $0xa]]
        %s1262 = sld [smem:[#allocation2 + $0x3b]]
        %v1263 = vstv %s1261
        %v1264 = vstv %s1262
        %v1265 = vsel %vm711, %v1263, %v1264
        %v1266 = vmul.f32 %v1265, %v680
        %v1267 = vmul.f32 %v1265, %v676
        %v1268 = vmul.f32 %v1265, %v681
        %1272 = vrot.lane.b32.xlu0 %v1266, 112
        %v1273 = vpop.permute.xlu0 %1272
        %1274 = vrot.lane.b32.xlu0 %v1267, 112
        %v1275 = vpop.permute.xlu0 %1274
        %1276 = vrot.lane.b32.xlu0 %v1268, 112
        %v1277 = vpop.permute.xlu0 %1276
        %v1278 = vsel %vm738, %v1273, %v1275
        %v1279 = vsel %vm738, %v1275, %v1277
        %v1283 = vadd.f32 %v1258, %v1278
        %v1284 = vadd.f32 %v1259, %v1279
        %v1285 = vadd.f32 %v1260, %v1277
        %s1286 = sld [smem:[#allocation2 + $0x11]]
        %s1287 = sld [smem:[#allocation2 + $0x42]]
        %v1288 = vstv %s1286
        %v1289 = vstv %s1287
        %v1290 = vsel %vm711, %v1288, %v1289
        %v1291 = vmul.f32 %v1290, %v680
        %v1292 = vmul.f32 %v1290, %v676
        %v1293 = vmul.f32 %v1290, %v681
        %1297 = vrot.lane.b32.xlu0 %v1291, 96
        %v1298 = vpop.permute.xlu0 %1297
        %1299 = vrot.lane.b32.xlu0 %v1292, 96
        %v1300 = vpop.permute.xlu0 %1299
        %1301 = vrot.lane.b32.xlu0 %v1293, 96
        %v1302 = vpop.permute.xlu0 %1301
        %v1303 = vsel %vm762, %v1298, %v1300
        %v1304 = vsel %vm762, %v1300, %v1302
        %v1308 = vadd.f32 %v1283, %v1303
        %v1309 = vadd.f32 %v1284, %v1304
        %v1310 = vadd.f32 %v1285, %v1302
        %s1311 = sld [smem:[#allocation2 + $0x18]]
        %s1312 = sld [smem:[#allocation2 + $0x49]]
        %v1313 = vstv %s1311
        %v1314 = vstv %s1312
        %v1315 = vsel %vm711, %v1313, %v1314
        %v1316 = vmul.f32 %v1315, %v680
        %v1317 = vmul.f32 %v1315, %v676
        %v1318 = vmul.f32 %v1315, %v681
        %1322 = vrot.lane.b32.xlu0 %v1316, 80
        %v1323 = vpop.permute.xlu0 %1322
        %1324 = vrot.lane.b32.xlu0 %v1317, 80
        %v1325 = vpop.permute.xlu0 %1324
        %1326 = vrot.lane.b32.xlu0 %v1318, 80
        %v1327 = vpop.permute.xlu0 %1326
        %v1328 = vsel %vm786, %v1323, %v1325
        %v1329 = vsel %vm786, %v1325, %v1327
        %v1333 = vadd.f32 %v1308, %v1328
        %v1334 = vadd.f32 %v1309, %v1329
        %v1335 = vadd.f32 %v1310, %v1327
        %s1336 = sld [smem:[#allocation2 + $0x1f]]
        %s1337 = sld [smem:[#allocation2 + $0x50]]
        %v1338 = vstv %s1336
        %v1339 = vstv %s1337
        %v1340 = vsel %vm711, %v1338, %v1339
        %v1341 = vmul.f32 %v1340, %v680
        %v1342 = vmul.f32 %v1340, %v676
        %v1343 = vmul.f32 %v1340, %v681
        %1347 = vrot.lane.b32.xlu0 %v1341, 64
        %v1348 = vpop.permute.xlu0 %1347
        %1349 = vrot.lane.b32.xlu0 %v1342, 64
        %v1350 = vpop.permute.xlu0 %1349
        %1351 = vrot.lane.b32.xlu0 %v1343, 64
        %v1352 = vpop.permute.xlu0 %1351
        %v1353 = vsel %vm810, %v1348, %v1350
        %v1354 = vsel %vm810, %v1350, %v1352
        %v1358 = vadd.f32 %v1333, %v1353
        %v1359 = vadd.f32 %v1334, %v1354
        %v1360 = vadd.f32 %v1335, %v1352
        %s1361 = sld [smem:[#allocation2 + $0x26]]
        %s1362 = sld [smem:[#allocation2 + $0x57]]
        %v1363 = vstv %s1361
        %v1364 = vstv %s1362
        %v1365 = vsel %vm711, %v1363, %v1364
        %v1366 = vmul.f32 %v1365, %v680
        %v1367 = vmul.f32 %v1365, %v676
        %v1368 = vmul.f32 %v1365, %v681
        %1372 = vrot.lane.b32.xlu0 %v1366, 48
        %v1373 = vpop.permute.xlu0 %1372
        %1374 = vrot.lane.b32.xlu0 %v1367, 48
        %v1375 = vpop.permute.xlu0 %1374
        %1376 = vrot.lane.b32.xlu0 %v1368, 48
        %v1377 = vpop.permute.xlu0 %1376
        %v1378 = vsel %vm834, %v1373, %v1375
        %v1379 = vsel %vm834, %v1375, %v1377
        %v1383 = vadd.f32 %v1358, %v1378
        %v1384 = vadd.f32 %v1359, %v1379
        %v1385 = vadd.f32 %v1360, %v1377
        %s1386 = sld [smem:[#allocation2 + $0x2d]]
        %s1387 = sld [smem:[#allocation2 + $0x5e]]
        %v1388 = vstv %s1386
        %v1389 = vstv %s1387
        %v1390 = vsel %vm711, %v1388, %v1389
        %v1391 = vmul.f32 %v1390, %v680
        %v1392 = vmul.f32 %v1390, %v676
        %v1393 = vmul.f32 %v1390, %v681
        %1397 = vrot.lane.b32.xlu0 %v1391, 32
        %v1398 = vpop.permute.xlu0 %1397
        %1399 = vrot.lane.b32.xlu0 %v1392, 32
        %v1400 = vpop.permute.xlu0 %1399
        %1401 = vrot.lane.b32.xlu0 %v1393, 32
        %v1402 = vpop.permute.xlu0 %1401
        %v1403 = vsel %vm341, %v1398, %v1400
        %v1404 = vsel %vm341, %v1400, %v1402
        %v1408 = vadd.f32 %v1383, %v1403
        %v1409 = vadd.f32 %v1384, %v1404
        %v1410 = vadd.f32 %v1385, %v1402
        %vm1411 = vcmp.ge.s32.totalorder %v707, 0
        %vm1412 = vcmp.ge.s32.totalorder %v708, 0
        %vm1413 = vcmp.lt.s32.totalorder %v707, 16
        %vm1414 = vcmp.lt.s32.totalorder %v708, 16
        %vm1415 = vmand %vm1411, %vm1413
        %vm1416 = vmand %vm1412, %vm1414
        %1420 = vrot.lane.b32.xlu0 %v1408, 125
        %v1421 = vpop.permute.xlu0 %1420
        %1422 = vrot.lane.b32.xlu0 %v1409, 125
        %v1423 = vpop.permute.xlu0 %1422
        %1424 = vrot.lane.b32.xlu0 %v1410, 125
        %v1425 = vpop.permute.xlu0 %1424
        %vm1426 = vcmask 1022976
        %v1427 = vsel %vm1426, %v1421, %v1423
        %v1428 = vsel %vm1426, %v1423, %v1425
        %v1431 = vsel %vm1415, %v1427, 0.0
        %v1432 = vsel %vm1416, %v1428, 0.0
        %v1433 = vadd.f32 %v1248, %v1431
        %v1434 = vadd.f32 %v1249, %v1432
        %s1435 = sld [smem:[#allocation2 + $0x4]]
        %s1436 = sld [smem:[#allocation2 + $0x35]]
        %v1437 = vstv %s1435
        %v1438 = vstv %s1436
        %v1439 = vsel %vm711, %v1437, %v1438
        %v1440 = vmul.f32 %v1439, %v680
        %v1441 = vmul.f32 %v1439, %v676
        %v1442 = vmul.f32 %v1439, %v681
        %v1443 = vadd.f32 %v1440, 0.0
        %v1444 = vadd.f32 %v1441, 0.0
        %v1445 = vadd.f32 %v1442, 0.0
        %s1446 = sld [smem:[#allocation2 + $0xb]]
        %s1447 = sld [smem:[#allocation2 + $0x3c]]
        %v1448 = vstv %s1446
        %v1449 = vstv %s1447
        %v1450 = vsel %vm711, %v1448, %v1449
        %v1451 = vmul.f32 %v1450, %v680
        %v1452 = vmul.f32 %v1450, %v676
        %v1453 = vmul.f32 %v1450, %v681
        %1457 = vrot.lane.b32.xlu0 %v1451, 112
        %v1458 = vpop.permute.xlu0 %1457
        %1459 = vrot.lane.b32.xlu0 %v1452, 112
        %v1460 = vpop.permute.xlu0 %1459
        %1461 = vrot.lane.b32.xlu0 %v1453, 112
        %v1462 = vpop.permute.xlu0 %1461
        %v1463 = vsel %vm738, %v1458, %v1460
        %v1464 = vsel %vm738, %v1460, %v1462
        %v1468 = vadd.f32 %v1443, %v1463
        %v1469 = vadd.f32 %v1444, %v1464
        %v1470 = vadd.f32 %v1445, %v1462
        %s1471 = sld [smem:[#allocation2 + $0x12]]
        %s1472 = sld [smem:[#allocation2 + $0x43]]
        %v1473 = vstv %s1471
        %v1474 = vstv %s1472
        %v1475 = vsel %vm711, %v1473, %v1474
        %v1476 = vmul.f32 %v1475, %v680
        %v1477 = vmul.f32 %v1475, %v676
        %v1478 = vmul.f32 %v1475, %v681
        %1482 = vrot.lane.b32.xlu0 %v1476, 96
        %v1483 = vpop.permute.xlu0 %1482
        %1484 = vrot.lane.b32.xlu0 %v1477, 96
        %v1485 = vpop.permute.xlu0 %1484
        %1486 = vrot.lane.b32.xlu0 %v1478, 96
        %v1487 = vpop.permute.xlu0 %1486
        %v1488 = vsel %vm762, %v1483, %v1485
        %v1489 = vsel %vm762, %v1485, %v1487
        %v1493 = vadd.f32 %v1468, %v1488
        %v1494 = vadd.f32 %v1469, %v1489
        %v1495 = vadd.f32 %v1470, %v1487
        %s1496 = sld [smem:[#allocation2 + $0x19]]
        %s1497 = sld [smem:[#allocation2 + $0x4a]]
        %v1498 = vstv %s1496
        %v1499 = vstv %s1497
        %v1500 = vsel %vm711, %v1498, %v1499
        %v1501 = vmul.f32 %v1500, %v680
        %v1502 = vmul.f32 %v1500, %v676
        %v1503 = vmul.f32 %v1500, %v681
        %1507 = vrot.lane.b32.xlu0 %v1501, 80
        %v1508 = vpop.permute.xlu0 %1507
        %1509 = vrot.lane.b32.xlu0 %v1502, 80
        %v1510 = vpop.permute.xlu0 %1509
        %1511 = vrot.lane.b32.xlu0 %v1503, 80
        %v1512 = vpop.permute.xlu0 %1511
        %v1513 = vsel %vm786, %v1508, %v1510
        %v1514 = vsel %vm786, %v1510, %v1512
        %v1518 = vadd.f32 %v1493, %v1513
        %v1519 = vadd.f32 %v1494, %v1514
        %v1520 = vadd.f32 %v1495, %v1512
        %s1521 = sld [smem:[#allocation2 + $0x20]]
        %s1522 = sld [smem:[#allocation2 + $0x51]]
        %v1523 = vstv %s1521
        %v1524 = vstv %s1522
        %v1525 = vsel %vm711, %v1523, %v1524
        %v1526 = vmul.f32 %v1525, %v680
        %v1527 = vmul.f32 %v1525, %v676
        %v1528 = vmul.f32 %v1525, %v681
        %1532 = vrot.lane.b32.xlu0 %v1526, 64
        %v1533 = vpop.permute.xlu0 %1532
        %1534 = vrot.lane.b32.xlu0 %v1527, 64
        %v1535 = vpop.permute.xlu0 %1534
        %1536 = vrot.lane.b32.xlu0 %v1528, 64
        %v1537 = vpop.permute.xlu0 %1536
        %v1538 = vsel %vm810, %v1533, %v1535
        %v1539 = vsel %vm810, %v1535, %v1537
        %v1543 = vadd.f32 %v1518, %v1538
        %v1544 = vadd.f32 %v1519, %v1539
        %v1545 = vadd.f32 %v1520, %v1537
        %s1546 = sld [smem:[#allocation2 + $0x27]]
        %s1547 = sld [smem:[#allocation2 + $0x58]]
        %v1548 = vstv %s1546
        %v1549 = vstv %s1547
        %v1550 = vsel %vm711, %v1548, %v1549
        %v1551 = vmul.f32 %v1550, %v680
        %v1552 = vmul.f32 %v1550, %v676
        %v1553 = vmul.f32 %v1550, %v681
        %1557 = vrot.lane.b32.xlu0 %v1551, 48
        %v1558 = vpop.permute.xlu0 %1557
        %1559 = vrot.lane.b32.xlu0 %v1552, 48
        %v1560 = vpop.permute.xlu0 %1559
        %1561 = vrot.lane.b32.xlu0 %v1553, 48
        %v1562 = vpop.permute.xlu0 %1561
        %v1563 = vsel %vm834, %v1558, %v1560
        %v1564 = vsel %vm834, %v1560, %v1562
        %v1568 = vadd.f32 %v1543, %v1563
        %v1569 = vadd.f32 %v1544, %v1564
        %v1570 = vadd.f32 %v1545, %v1562
        %s1571 = sld [smem:[#allocation2 + $0x2e]]
        %s1572 = sld [smem:[#allocation2 + $0x5f]]
        %v1573 = vstv %s1571
        %v1574 = vstv %s1572
        %v1575 = vsel %vm711, %v1573, %v1574
        %v1576 = vmul.f32 %v1575, %v680
        %v1577 = vmul.f32 %v1575, %v676
        %v1578 = vmul.f32 %v1575, %v681
        %1582 = vrot.lane.b32.xlu0 %v1576, 32
        %v1583 = vpop.permute.xlu0 %1582
        %1584 = vrot.lane.b32.xlu0 %v1577, 32
        %v1585 = vpop.permute.xlu0 %1584
        %1586 = vrot.lane.b32.xlu0 %v1578, 32
        %v1587 = vpop.permute.xlu0 %1586
        %v1588 = vsel %vm341, %v1583, %v1585
        %v1589 = vsel %vm341, %v1585, %v1587
        %v1593 = vadd.f32 %v1568, %v1588
        %v1594 = vadd.f32 %v1569, %v1589
        %v1595 = vadd.f32 %v1570, %v1587
        %v1596 = vadd.s32 %v707, 1
        %v1597 = vadd.s32 %v708, 1
        %vm1598 = vcmp.ge.s32.totalorder %v1596, 0
        %vm1599 = vcmp.ge.s32.totalorder %v1597, 0
        %vm1600 = vcmp.lt.s32.totalorder %v1596, 16
        %vm1601 = vcmp.lt.s32.totalorder %v1597, 16
        %vm1602 = vmand %vm1598, %vm1600
        %vm1603 = vmand %vm1599, %vm1601
        %1607 = vrot.lane.b32.xlu0 %v1593, 124
        %v1608 = vpop.permute.xlu0 %1607
        %1609 = vrot.lane.b32.xlu0 %v1594, 124
        %v1610 = vpop.permute.xlu0 %1609
        %1611 = vrot.lane.b32.xlu0 %v1595, 124
        %v1612 = vpop.permute.xlu0 %1611
        %vm1613 = vcmask 1014784
        %v1614 = vsel %vm1613, %v1608, %v1610
        %v1615 = vsel %vm1613, %v1610, %v1612
        %v1618 = vsel %vm1602, %v1614, 0.0
        %v1619 = vsel %vm1603, %v1615, 0.0
        %v1620 = vadd.f32 %v1433, %v1618
        %v1621 = vadd.f32 %v1434, %v1619
        %s1622 = sld [smem:[#allocation2 + $0x5]]
        %s1623 = sld [smem:[#allocation2 + $0x36]]
        %v1624 = vstv %s1622
        %v1625 = vstv %s1623
        %v1626 = vsel %vm711, %v1624, %v1625
        %v1627 = vmul.f32 %v1626, %v680
        %v1628 = vmul.f32 %v1626, %v676
        %v1629 = vmul.f32 %v1626, %v681
        %v1630 = vadd.f32 %v1627, 0.0
        %v1631 = vadd.f32 %v1628, 0.0
        %v1632 = vadd.f32 %v1629, 0.0
        %s1633 = sld [smem:[#allocation2 + $0xc]]
        %s1634 = sld [smem:[#allocation2 + $0x3d]]
        %v1635 = vstv %s1633
        %v1636 = vstv %s1634
        %v1637 = vsel %vm711, %v1635, %v1636
        %v1638 = vmul.f32 %v1637, %v680
        %v1639 = vmul.f32 %v1637, %v676
        %v1640 = vmul.f32 %v1637, %v681
        %1644 = vrot.lane.b32.xlu0 %v1638, 112
        %v1645 = vpop.permute.xlu0 %1644
        %1646 = vrot.lane.b32.xlu0 %v1639, 112
        %v1647 = vpop.permute.xlu0 %1646
        %1648 = vrot.lane.b32.xlu0 %v1640, 112
        %v1649 = vpop.permute.xlu0 %1648
        %v1650 = vsel %vm738, %v1645, %v1647
        %v1651 = vsel %vm738, %v1647, %v1649
        %v1655 = vadd.f32 %v1630, %v1650
        %v1656 = vadd.f32 %v1631, %v1651
        %v1657 = vadd.f32 %v1632, %v1649
        %s1658 = sld [smem:[#allocation2 + $0x13]]
        %s1659 = sld [smem:[#allocation2 + $0x44]]
        %v1660 = vstv %s1658
        %v1661 = vstv %s1659
        %v1662 = vsel %vm711, %v1660, %v1661
        %v1663 = vmul.f32 %v1662, %v680
        %v1664 = vmul.f32 %v1662, %v676
        %v1665 = vmul.f32 %v1662, %v681
        %1669 = vrot.lane.b32.xlu0 %v1663, 96
        %v1670 = vpop.permute.xlu0 %1669
        %1671 = vrot.lane.b32.xlu0 %v1664, 96
        %v1672 = vpop.permute.xlu0 %1671
        %1673 = vrot.lane.b32.xlu0 %v1665, 96
        %v1674 = vpop.permute.xlu0 %1673
        %v1675 = vsel %vm762, %v1670, %v1672
        %v1676 = vsel %vm762, %v1672, %v1674
        %v1680 = vadd.f32 %v1655, %v1675
        %v1681 = vadd.f32 %v1656, %v1676
        %v1682 = vadd.f32 %v1657, %v1674
        %s1683 = sld [smem:[#allocation2 + $0x1a]]
        %s1684 = sld [smem:[#allocation2 + $0x4b]]
        %v1685 = vstv %s1683
        %v1686 = vstv %s1684
        %v1687 = vsel %vm711, %v1685, %v1686
        %v1688 = vmul.f32 %v1687, %v680
        %v1689 = vmul.f32 %v1687, %v676
        %v1690 = vmul.f32 %v1687, %v681
        %1694 = vrot.lane.b32.xlu0 %v1688, 80
        %v1695 = vpop.permute.xlu0 %1694
        %1696 = vrot.lane.b32.xlu0 %v1689, 80
        %v1697 = vpop.permute.xlu0 %1696
        %1698 = vrot.lane.b32.xlu0 %v1690, 80
        %v1699 = vpop.permute.xlu0 %1698
        %v1700 = vsel %vm786, %v1695, %v1697
        %v1701 = vsel %vm786, %v1697, %v1699
        %v1705 = vadd.f32 %v1680, %v1700
        %v1706 = vadd.f32 %v1681, %v1701
        %v1707 = vadd.f32 %v1682, %v1699
        %s1708 = sld [smem:[#allocation2 + $0x21]]
        %s1709 = sld [smem:[#allocation2 + $0x52]]
        %v1710 = vstv %s1708
        %v1711 = vstv %s1709
        %v1712 = vsel %vm711, %v1710, %v1711
        %v1713 = vmul.f32 %v1712, %v680
        %v1714 = vmul.f32 %v1712, %v676
        %v1715 = vmul.f32 %v1712, %v681
        %1719 = vrot.lane.b32.xlu0 %v1713, 64
        %v1720 = vpop.permute.xlu0 %1719
        %1721 = vrot.lane.b32.xlu0 %v1714, 64
        %v1722 = vpop.permute.xlu0 %1721
        %1723 = vrot.lane.b32.xlu0 %v1715, 64
        %v1724 = vpop.permute.xlu0 %1723
        %v1725 = vsel %vm810, %v1720, %v1722
        %v1726 = vsel %vm810, %v1722, %v1724
        %v1730 = vadd.f32 %v1705, %v1725
        %v1731 = vadd.f32 %v1706, %v1726
        %v1732 = vadd.f32 %v1707, %v1724
        %s1733 = sld [smem:[#allocation2 + $0x28]]
        %s1734 = sld [smem:[#allocation2 + $0x59]]
        %v1735 = vstv %s1733
        %v1736 = vstv %s1734
        %v1737 = vsel %vm711, %v1735, %v1736
        %v1738 = vmul.f32 %v1737, %v680
        %v1739 = vmul.f32 %v1737, %v676
        %v1740 = vmul.f32 %v1737, %v681
        %1744 = vrot.lane.b32.xlu0 %v1738, 48
        %v1745 = vpop.permute.xlu0 %1744
        %1746 = vrot.lane.b32.xlu0 %v1739, 48
        %v1747 = vpop.permute.xlu0 %1746
        %1748 = vrot.lane.b32.xlu0 %v1740, 48
        %v1749 = vpop.permute.xlu0 %1748
        %v1750 = vsel %vm834, %v1745, %v1747
        %v1751 = vsel %vm834, %v1747, %v1749
        %v1755 = vadd.f32 %v1730, %v1750
        %v1756 = vadd.f32 %v1731, %v1751
        %v1757 = vadd.f32 %v1732, %v1749
        %s1758 = sld [smem:[#allocation2 + $0x2f]]
        %s1759 = sld [smem:[#allocation2 + $0x60]]
        %v1760 = vstv %s1758
        %v1761 = vstv %s1759
        %v1762 = vsel %vm711, %v1760, %v1761
        %v1763 = vmul.f32 %v1762, %v680
        %v1764 = vmul.f32 %v1762, %v676
        %v1765 = vmul.f32 %v1762, %v681
        %1769 = vrot.lane.b32.xlu0 %v1763, 32
        %v1770 = vpop.permute.xlu0 %1769
        %1771 = vrot.lane.b32.xlu0 %v1764, 32
        %v1772 = vpop.permute.xlu0 %1771
        %1773 = vrot.lane.b32.xlu0 %v1765, 32
        %v1774 = vpop.permute.xlu0 %1773
        %v1775 = vsel %vm341, %v1770, %v1772
        %v1776 = vsel %vm341, %v1772, %v1774
        %v1780 = vadd.f32 %v1755, %v1775
        %v1781 = vadd.f32 %v1756, %v1776
        %v1782 = vadd.f32 %v1757, %v1774
        %v1783 = vadd.s32 %v707, 2
        %v1784 = vadd.s32 %v708, 2
        %vm1785 = vcmp.ge.s32.totalorder %v1783, 0
        %vm1786 = vcmp.ge.s32.totalorder %v1784, 0
        %vm1787 = vcmp.lt.s32.totalorder %v1783, 16
        %vm1788 = vcmp.lt.s32.totalorder %v1784, 16
        %vm1789 = vmand %vm1785, %vm1787
        %vm1790 = vmand %vm1786, %vm1788
        %1794 = vrot.lane.b32.xlu0 %v1780, 123
        %v1795 = vpop.permute.xlu0 %1794
        %1796 = vrot.lane.b32.xlu0 %v1781, 123
        %v1797 = vpop.permute.xlu0 %1796
        %1798 = vrot.lane.b32.xlu0 %v1782, 123
        %v1799 = vpop.permute.xlu0 %1798
        %vm1800 = vcmask 1006592
        %v1801 = vsel %vm1800, %v1795, %v1797
        %v1802 = vsel %vm1800, %v1797, %v1799
        %v1805 = vsel %vm1789, %v1801, 0.0
        %v1806 = vsel %vm1790, %v1802, 0.0
        %v1807 = vadd.f32 %v1620, %v1805
        %v1808 = vadd.f32 %v1621, %v1806
        %s1809 = sld [smem:[#allocation2 + $0x6]]
        %s1810 = sld [smem:[#allocation2 + $0x37]]
        %v1811 = vstv %s1809
        %v1812 = vstv %s1810
        %v1813 = vsel %vm711, %v1811, %v1812
        %v1814 = vmul.f32 %v1813, %v680
        %v1815 = vmul.f32 %v1813, %v676
        %v1816 = vmul.f32 %v1813, %v681
        %v1817 = vadd.f32 %v1814, 0.0
        %v1818 = vadd.f32 %v1815, 0.0
        %v1819 = vadd.f32 %v1816, 0.0
        %s1820 = sld [smem:[#allocation2 + $0xd]]
        %s1821 = sld [smem:[#allocation2 + $0x3e]]
        %v1822 = vstv %s1820
        %v1823 = vstv %s1821
        %v1824 = vsel %vm711, %v1822, %v1823
        %v1825 = vmul.f32 %v1824, %v680
        %v1826 = vmul.f32 %v1824, %v676
        %v1827 = vmul.f32 %v1824, %v681
        %1831 = vrot.lane.b32.xlu0 %v1825, 112
        %v1832 = vpop.permute.xlu0 %1831
        %1833 = vrot.lane.b32.xlu0 %v1826, 112
        %v1834 = vpop.permute.xlu0 %1833
        %1835 = vrot.lane.b32.xlu0 %v1827, 112
        %v1836 = vpop.permute.xlu0 %1835
        %v1837 = vsel %vm738, %v1832, %v1834
        %v1838 = vsel %vm738, %v1834, %v1836
        %v1842 = vadd.f32 %v1817, %v1837
        %v1843 = vadd.f32 %v1818, %v1838
        %v1844 = vadd.f32 %v1819, %v1836
        %s1845 = sld [smem:[#allocation2 + $0x14]]
        %s1846 = sld [smem:[#allocation2 + $0x45]]
        %v1847 = vstv %s1845
        %v1848 = vstv %s1846
        %v1849 = vsel %vm711, %v1847, %v1848
        %v1850 = vmul.f32 %v1849, %v680
        %v1851 = vmul.f32 %v1849, %v676
        %v1852 = vmul.f32 %v1849, %v681
        %1856 = vrot.lane.b32.xlu0 %v1850, 96
        %v1857 = vpop.permute.xlu0 %1856
        %1858 = vrot.lane.b32.xlu0 %v1851, 96
        %v1859 = vpop.permute.xlu0 %1858
        %1860 = vrot.lane.b32.xlu0 %v1852, 96
        %v1861 = vpop.permute.xlu0 %1860
        %v1862 = vsel %vm762, %v1857, %v1859
        %v1863 = vsel %vm762, %v1859, %v1861
        %v1867 = vadd.f32 %v1842, %v1862
        %v1868 = vadd.f32 %v1843, %v1863
        %v1869 = vadd.f32 %v1844, %v1861
        %s1870 = sld [smem:[#allocation2 + $0x1b]]
        %s1871 = sld [smem:[#allocation2 + $0x4c]]
        %v1872 = vstv %s1870
        %v1873 = vstv %s1871
        %v1874 = vsel %vm711, %v1872, %v1873
        %v1875 = vmul.f32 %v1874, %v680
        %v1876 = vmul.f32 %v1874, %v676
        %v1877 = vmul.f32 %v1874, %v681
        %1881 = vrot.lane.b32.xlu0 %v1875, 80
        %v1882 = vpop.permute.xlu0 %1881
        %1883 = vrot.lane.b32.xlu0 %v1876, 80
        %v1884 = vpop.permute.xlu0 %1883
        %1885 = vrot.lane.b32.xlu0 %v1877, 80
        %v1886 = vpop.permute.xlu0 %1885
        %v1887 = vsel %vm786, %v1882, %v1884
        %v1888 = vsel %vm786, %v1884, %v1886
        %v1892 = vadd.f32 %v1867, %v1887
        %v1893 = vadd.f32 %v1868, %v1888
        %v1894 = vadd.f32 %v1869, %v1886
        %s1895 = sld [smem:[#allocation2 + $0x22]]
        %s1896 = sld [smem:[#allocation2 + $0x53]]
        %v1897 = vstv %s1895
        %v1898 = vstv %s1896
        %v1899 = vsel %vm711, %v1897, %v1898
        %v1900 = vmul.f32 %v1899, %v680
        %v1901 = vmul.f32 %v1899, %v676
        %v1902 = vmul.f32 %v1899, %v681
        %1906 = vrot.lane.b32.xlu0 %v1900, 64
        %v1907 = vpop.permute.xlu0 %1906
        %1908 = vrot.lane.b32.xlu0 %v1901, 64
        %v1909 = vpop.permute.xlu0 %1908
        %1910 = vrot.lane.b32.xlu0 %v1902, 64
        %v1911 = vpop.permute.xlu0 %1910
        %v1912 = vsel %vm810, %v1907, %v1909
        %v1913 = vsel %vm810, %v1909, %v1911
        %v1917 = vadd.f32 %v1892, %v1912
        %v1918 = vadd.f32 %v1893, %v1913
        %v1919 = vadd.f32 %v1894, %v1911
        %s1920 = sld [smem:[#allocation2 + $0x29]]
        %s1921 = sld [smem:[#allocation2 + $0x5a]]
        %v1922 = vstv %s1920
        %v1923 = vstv %s1921
        %v1924 = vsel %vm711, %v1922, %v1923
        %v1925 = vmul.f32 %v1924, %v680
        %v1926 = vmul.f32 %v1924, %v676
        %v1927 = vmul.f32 %v1924, %v681
        %1931 = vrot.lane.b32.xlu0 %v1925, 48
        %v1932 = vpop.permute.xlu0 %1931
        %1933 = vrot.lane.b32.xlu0 %v1926, 48
        %v1934 = vpop.permute.xlu0 %1933
        %1935 = vrot.lane.b32.xlu0 %v1927, 48
        %v1936 = vpop.permute.xlu0 %1935
        %v1937 = vsel %vm834, %v1932, %v1934
        %v1938 = vsel %vm834, %v1934, %v1936
        %v1942 = vadd.f32 %v1917, %v1937
        %v1943 = vadd.f32 %v1918, %v1938
        %v1944 = vadd.f32 %v1919, %v1936
        %s1945 = sld [smem:[#allocation2 + $0x30]]
        %s1946 = sld [smem:[#allocation2 + $0x61]]
        %v1947 = vstv %s1945
        %v1948 = vstv %s1946
        %v1949 = vsel %vm711, %v1947, %v1948
        %v1950 = vmul.f32 %v1949, %v680
        %v1951 = vmul.f32 %v1949, %v676
        %v1952 = vmul.f32 %v1949, %v681
        %1956 = vrot.lane.b32.xlu0 %v1950, 32
        %v1957 = vpop.permute.xlu0 %1956
        %1958 = vrot.lane.b32.xlu0 %v1951, 32
        %v1959 = vpop.permute.xlu0 %1958
        %1960 = vrot.lane.b32.xlu0 %v1952, 32
        %v1961 = vpop.permute.xlu0 %1960
        %v1962 = vsel %vm341, %v1957, %v1959
        %v1963 = vsel %vm341, %v1959, %v1961
        %v1967 = vadd.f32 %v1942, %v1962
        %v1968 = vadd.f32 %v1943, %v1963
        %v1969 = vadd.f32 %v1944, %v1961
        %v1970 = vadd.s32 %v707, 3
        %v1971 = vadd.s32 %v708, 3
        %vm1972 = vcmp.ge.s32.totalorder %v1970, 0
        %vm1973 = vcmp.ge.s32.totalorder %v1971, 0
        %vm1974 = vcmp.lt.s32.totalorder %v1970, 16
        %vm1975 = vcmp.lt.s32.totalorder %v1971, 16
        %vm1976 = vmand %vm1972, %vm1974
        %vm1977 = vmand %vm1973, %vm1975
        %1981 = vrot.lane.b32.xlu0 %v1967, 122
        %v1982 = vpop.permute.xlu0 %1981
        %1983 = vrot.lane.b32.xlu0 %v1968, 122
        %v1984 = vpop.permute.xlu0 %1983
        %1985 = vrot.lane.b32.xlu0 %v1969, 122
        %v1986 = vpop.permute.xlu0 %1985
        %vm1987 = vcmask 998400
        %v1988 = vsel %vm1987, %v1982, %v1984
        %v1989 = vsel %vm1987, %v1984, %v1986
        %v1992 = vsel %vm1976, %v1988, 0.0
        %v1993 = vsel %vm1977, %v1989, 0.0
        %v1994 = vadd.f32 %v1807, %v1992
        %v1995 = vadd.f32 %v1808, %v1993
        %v1996 = vsel %vm433, %v1994, 0.0
        %v1997 = vrot.slane %v1996, 4
        %v1998 = vadd.f32 %v1996, %v1997
        %v1999 = vrot.slane %v1998, 2
        %v2000 = vadd.f32 %v1998, %v1999
        %v2001 = vrot.slane %v2000, 1
        %v2002 = vadd.f32 %v2000, %v2001
        %v2003 = vsel %vm433, %v1995, 0.0
        %v2004 = vrot.slane %v2003, 4
        %v2005 = vadd.f32 %v2003, %v2004
        %v2006 = vrot.slane %v2005, 2
        %v2007 = vadd.f32 %v2005, %v2006
        %v2008 = vrot.slane %v2007, 1
        %v2009 = vadd.f32 %v2007, %v2008
        %v2010 = vmul.f32 %v2002, 0.5
        %v2011 = vmul.f32 %v2009, 0.5
        %v2012 = vtanh.pop %v2010
        %v2013 = vtanh.pop %v2011
        %v2014 = vadd.f32 %v2012, 1.0
        %v2015 = vadd.f32 %v2013, 1.0
        %v2016 = vmul.f32 %v2014, 0.5
        %v2017 = vmul.f32 %v2015, 0.5
        %v2018 = vmul.f32 %v566, %v2016
        %v2019 = vmul.f32 %v567, %v2017
        %v2020 = vmul.f32 %v568, %v2016
        %v2021 = vmul.f32 %v569, %v2017
        %v2022 = vmul.f32 %v570, %v2016
        %v2023 = vmul.f32 %v571, %v2017
        %v2024 = vmul.f32 %v572, %v2016
        %v2025 = vmul.f32 %v573, %v2017
        %2026 = vst [vmem:[%s229] sm:$0xff] %v2018
        %2027 = vst [vmem:[%s229 + $0x8] sm:$0xff] %v2019
        %2028 = vst [vmem:[%s229 + $0x10] sm:$0xff] %v2020
        %2029 = vst [vmem:[%s229 + $0x18] sm:$0xff] %v2021
        %2030 = vst [vmem:[%s229 + $0x20] sm:$0xff] %v2022
        %2031 = vst [vmem:[%s229 + $0x28] sm:$0xff] %v2023
        %2032 = vst [vmem:[%s229 + $0x30] sm:$0xff] %v2024
        %2033 = vst [vmem:[%s229 + $0x38] sm:$0xff] %v2025
        %s2034 = sand.u32 %s119, 1
        %s2035 = scalar_lea.sflag [#allocation4], %s2034
        %s2036 = sand.u32 %s119, 1
        %s2037 = smul.addr %s2036, 64
        %s2038 = scalar_lea.vmem [#allocation7], %s2037
        // Predicated region
        $region45: #{tpu_custom_call.1} parent=35 // pred_check
          %p2039 = pneg %p129
        $region46: #{tpu_custom_call.1} parent=35 // pred_check_branch
          %2041 = sbr.rel (%p2039) target = $region48
        $region47: #{tpu_custom_call.1} parent=35 // pred_region
          %s2043 = ssub.s32 1024, 1024
          %2044 = vsyncadd %s2035, %s2043
          %s2045 = smul.addr %s22, 8
          %s2046 = smul.addr %s2045, 128
          %s2047 = scalar_lea.hbm %s4, %s2046
          %s2048 = sshll.u32 %s2038, 4
          %s2049 = int_to_ptr.vmem [resolvable:$true] %s2048
          %2054 = dma.vmem_to_hbm [thread:$0]  %s2049, 1024, %s2047, %s2035, 256, 256, 16
        $region48: #{tpu_custom_call.1} parent=35 // pred_fallthru
          _
      $region36: #{tpu_custom_call.1} parent=5 // pred_fallthru
        _
      %p2055 = scmp.le.s32.totalorder 2, %s17
      // Predicated region
      $region49: #{tpu_custom_call.1} parent=5 // pred_check
        %p2056 = pneg %p2055
      $region50: #{tpu_custom_call.1} parent=5 // pred_check_branch
        %2058 = sbr.rel (%p2056) target = $region52
      $region51: #{tpu_custom_call.1} parent=5 // pred_region
        %s2059 = ssub.s32 %s17, 2
        // Predicated region
        $region53: #{tpu_custom_call.1} parent=51 // pred_check
          %p2060 = pneg %p135
        $region54: #{tpu_custom_call.1} parent=51 // pred_check_branch
          %2062 = sbr.rel (%p2060) target = $region56
        $region55: #{tpu_custom_call.1} parent=51 // pred_region
          %s2063 = sand.u32 %s120, 1
          %s2064 = scalar_lea.sflag [#allocation4], %s2063
          %s2065 = sand.u32 %s120, 1
          %s2066 = smul.addr %s2065, 64
          %s2067 = scalar_lea.vmem [#allocation7], %s2066
          %2068 = dma.done %s2064, 1024
        $region56: #{tpu_custom_call.1} parent=51 // pred_fallthru
          _
      $region52: #{tpu_custom_call.1} parent=5 // pred_fallthru
        _
    $region6: #{tpu_custom_call.1} parent=1 // loop_footer
      %s21 = sadd.s32 1, %s17
    $region7: #{tpu_custom_call.1} parent=1 // loop_footer_branch
      %16 = sbr.rel target = $region3
    $region8: #{tpu_custom_call.1} parent=1 // loop_exit
      _
    %2069 = vsyncpa [#allocation3], 1
    %s2070 = scalar_lea.sflag [#allocation3], 1
    %2071 = vsyncpa %s2070, 1
    %2072 = vsyncpa [#allocation4], 1
    %s2073 = scalar_lea.sflag [#allocation4], 1
    %2074 = vsyncpa %s2073, 1
    %2075 = vsyncpa [#allocation5], 1
    %s2076 = scalar_lea.sflag [#allocation5], 1
    %2077 = vsyncpa %s2076, 1

</llo_original>
